<compile_context>
chip_gen: v5e
topology: v5e:2x2
jax: 0.10.0
libtpu: 0.0.40
codegen_flags: <defaults>
</compile_context>

<pallas_src>
import functools
import math

import jax
import jax.numpy as jnp
from jax import lax
from jax.experimental import pallas as pl
from jax.experimental.pallas import tpu as pltpu

# ----- Small model configuration (consistent with the BPNet forward) -----
NB_CONV = 4          # number of conv layers (first + 3 dilated residual)
NB_FILTERS = 32      # filters per conv layer
FIRST_KERNEL = 5     # kernel of the first conv
REST_KERNEL = 3      # kernel of dilated convs
PROFILE_KERNEL = 7   # profile head kernel
OUT_PRED_LEN = 64    # predicted bp window
IN_CHANNELS = 4      # one-hot DNA
BATCH = 2
SEQ_LEN = 128        # input sequence length


def _layer_lengths(L):
    """Static length bookkeeping reproducing the PyTorch forward's crops."""
    lens = [L - (FIRST_KERNEL - 1)]
    cur = lens[0]
    for i in range(1, NB_CONV):
        d = 2 ** i
        assert (REST_KERNEL - 1) * d % 2 == 0, "residual crop must be symmetric"
        cur = cur - (REST_KERNEL - 1) * d     # VALID conv, kernel 3, dilation d
        lens.append(cur)
    prof_full = cur - (PROFILE_KERNEL - 1)
    prof_crop = int(prof_full / 2 - OUT_PRED_LEN / 2)   # matches torch's int()
    prof_out = prof_full - 2 * prof_crop
    return lens, prof_full, prof_crop, prof_out


def bpnet_kernel(x_ref, w0_ref, b0_ref, wr_ref, br_ref,
                 wp_ref, bp_ref, wl_ref, bl_ref,
                 xout_ref, prof_ref, cnt_ref, x_scr, *, seq_len):
    """One batch element per grid program. All matmuls are 2-D MXU matmuls."""
    lens, _, prof_crop, prof_out = _layer_lengths(seq_len)
    l0 = lens[0]

    x_in = x_ref[...].astype(jnp.float32)            # (L, Cin)

    # ---- first conv via im2col: (l0, K*Cin) @ (K*Cin, F), then ReLU ----
    cols0 = jnp.concatenate(
        [x_in[k:k + l0, :] for k in range(FIRST_KERNEL)], axis=-1)   # (l0, 20)
    y0 = jnp.dot(cols0, w0_ref[...], preferred_element_type=jnp.float32)
    x_scr[...] = jnp.maximum(y0 + b0_ref[...], 0.0)  # running activation in VMEM

    # ---- dilated residual conv stack (one K=96 matmul per layer) ----
    cur_len = l0
    x = None
    for i in range(1, NB_CONV):
        d = 2 ** i
        out_len = lens[i]
        cols = jnp.concatenate(
            [x_scr[k * d:k * d + out_len, :] for k in range(REST_KERNEL)],
            axis=-1)                                  # (out_len, 3*F)
        y = jnp.dot(cols, wr_ref[i - 1], preferred_element_type=jnp.float32)
        conv_x = jnp.maximum(y + br_ref[i - 1], 0.0)
        crop = (cur_len - out_len) // 2
        x = conv_x + x_scr[crop:crop + out_len, :]    # residual add on cropped x
        x_scr[0:out_len, :] = x                       # stage back in scratch
        cur_len = out_len

    xout_ref[...] = x                                 # body output (Lx, F)

    # ---- profile head: im2col matmul (prof_out, 7*F) @ (7*F, 1) on the MXU ----
    pcols = jnp.concatenate(
        [x[prof_crop + k:prof_crop + k + prof_out, :]
         for k in range(PROFILE_KERNEL)], axis=-1)    # (prof_out, 224)
    prof = jnp.dot(pcols, wp_ref[...], preferred_element_type=jnp.float32)
    prof_ref[...] = prof + bp_ref[0, 0]               # (prof_out, 1) + SMEM scalar

    # ---- count head: global average pool + Linear(F, 1) ----
    pooled = jnp.mean(x, axis=0, keepdims=True)       # (1, F)
    cnt = jnp.dot(pooled, wl_ref[...], preferred_element_type=jnp.float32)
    cnt_ref[...] = cnt + bl_ref[0, 0]                 # (1, 1)


def init_params(key):
    """Deterministic PyTorch-style uniform(-1/sqrt(fan_in), 1/sqrt(fan_in)) init."""
    keys = jax.random.split(key, 8)

    def unif(k, shape, fan_in):
        bound = 1.0 / math.sqrt(fan_in)
        return jax.random.uniform(k, shape, jnp.float32, -bound, bound)

    return dict(
        w0=unif(keys[0], (FIRST_KERNEL, IN_CHANNELS, NB_FILTERS),
                IN_CHANNELS * FIRST_KERNEL),
        b0=unif(keys[1], (1, NB_FILTERS), IN_CHANNELS * FIRST_KERNEL),
        wr=unif(keys[2], (NB_CONV - 1, REST_KERNEL, NB_FILTERS, NB_FILTERS),
                NB_FILTERS * REST_KERNEL),
        br=unif(keys[3], (NB_CONV - 1, NB_FILTERS), NB_FILTERS * REST_KERNEL),
        wp=unif(keys[4], (PROFILE_KERNEL, NB_FILTERS),
                NB_FILTERS * PROFILE_KERNEL),
        bp=unif(keys[5], (1, 1), NB_FILTERS * PROFILE_KERNEL),
        wl=unif(keys[6], (NB_FILTERS, 1), NB_FILTERS),
        bl=unif(keys[7], (1, 1), NB_FILTERS),
    )


def bpnet_forward(x_ncl, params):
    """x_ncl: (B, C, L) like PyTorch. Returns (x_body_NCL, profile, count)."""
    B, _, L = x_ncl.shape
    lens, _, _, prof_out = _layer_lengths(L)
    x_blc = jnp.transpose(x_ncl, (0, 2, 1))           # -> channels-last (B, L, C)

    # Pre-reshape weights to im2col layout: row index = tap * Cin + cin.
    w0_2d = params['w0'].reshape(FIRST_KERNEL * IN_CHANNELS, NB_FILTERS)
    wr_2d = params['wr'].reshape(NB_CONV - 1, REST_KERNEL * NB_FILTERS, NB_FILTERS)
    wp_2d = params['wp'].reshape(PROFILE_KERNEL * NB_FILTERS, 1)

    def full_spec(shape):
        return pl.BlockSpec(shape, lambda b, _n=len(shape): (0,) * _n)

    smem_spec = pl.BlockSpec(memory_space=pltpu.MemorySpace.SMEM)

    out_shapes = (
        jax.ShapeDtypeStruct((B, lens[-1], NB_FILTERS), jnp.float32),  # body x
        jax.ShapeDtypeStruct((B, prof_out, 1), jnp.float32),           # profile
        jax.ShapeDtypeStruct((B, 1, 1), jnp.float32),                  # count
    )
    kernel = functools.partial(bpnet_kernel, seq_len=L)
    x_out, profile, count = pl.pallas_call(
        kernel,
        out_shape=out_shapes,
        grid=(B,),
        in_specs=[
            pl.BlockSpec((None, L, IN_CHANNELS), lambda b: (b, 0, 0)),  # x (per batch)
            full_spec(w0_2d.shape),          # (20, 32)
            full_spec(params['b0'].shape),   # (1, 32)
            full_spec(wr_2d.shape),          # (3, 96, 32)
            full_spec(params['br'].shape),   # (3, 32)
            full_spec(wp_2d.shape),          # (224, 1)
            smem_spec,                       # bp (1,1) scalar in SMEM
            full_spec(params['wl'].shape),   # (32, 1)
            smem_spec,                       # bl (1,1) scalar in SMEM
        ],
        out_specs=(
            pl.BlockSpec((None, lens[-1], NB_FILTERS), lambda b: (b, 0, 0)),
            pl.BlockSpec((None, prof_out, 1), lambda b: (b, 0, 0)),
            pl.BlockSpec((None, 1, 1), lambda b: (b, 0, 0)),
        ),
        scratch_shapes=[pltpu.VMEM((lens[0], NB_FILTERS), jnp.float32)],
        compiler_params=pltpu.CompilerParams(
            dimension_semantics=("parallel",)),   # both TCs on v7x; no-op v5e/v6e
    )(x_blc, w0_2d, params['b0'], wr_2d, params['br'],
      wp_2d, params['bp'], params['wl'], params['bl'])

    # PyTorch returns body x as (B, C, L); profile.squeeze() -> (B, prof_out)
    # for B > 1; count after Linear -> (B, 1).
    return jnp.transpose(x_out, (0, 2, 1)), profile[..., 0], count[..., 0]


# -------- pure-JAX reference (lax convs) for correctness checking --------
def _ref_conv1d(x, w_kio, b, dilation):
    # x: (B, C, L); w_kio: (K, In, Out); returns (B, Out, L')
    w = jnp.transpose(w_kio, (2, 1, 0))            # (O, I, K)
    y = lax.conv_general_dilated(x, w, window_strides=(1,), padding='VALID',
                                 rhs_dilation=(dilation,),
                                 dimension_numbers=('NCH', 'OIH', 'NCH'))
    return y + b.reshape(1, -1, 1)


def ref_forward(x, params):
    x = jax.nn.relu(_ref_conv1d(x, params['w0'], params['b0'].reshape(-1), 1))
    for i in range(1, NB_CONV):
        d = 2 ** i
        conv_x = jax.nn.relu(
            _ref_conv1d(x, params['wr'][i - 1], params['br'][i - 1], d))
        crop = (x.shape[2] - conv_x.shape[2]) // 2
        x = conv_x + x[:, :, crop:-crop]
    prof = _ref_conv1d(x, params['wp'][:, :, None], params['bp'].reshape(-1), 1)
    crop = int(prof.shape[2] / 2 - OUT_PRED_LEN / 2)
    prof = jnp.squeeze(prof[:, :, crop:-crop], axis=1)
    count = jnp.mean(x, axis=2) @ params['wl'] + params['bl']
    return x, prof, count


if __name__ == "__main__":
    key = jax.random.PRNGKey(0)
    kx, kp = jax.random.split(key)
    x = jax.random.normal(kx, (BATCH, IN_CHANNELS, SEQ_LEN), jnp.float32)
    params = init_params(kp)

    x_out, profile, count = bpnet_forward(x, params)
    jax.block_until_ready((x_out, profile, count))

    xr, pr, cr = ref_forward(x, params)
    assert x_out.shape == xr.shape and profile.shape == pr.shape and count.shape == cr.shape
    assert jnp.allclose(x_out, xr, atol=1e-4, rtol=1e-4)
    assert jnp.allclose(profile, pr, atol=1e-4, rtol=1e-4)
    assert jnp.allclose(count, cr, atol=1e-4, rtol=1e-4)

    print("KERNEL_OK")
</pallas_src>

<mosaic_0001>
module attributes {stable_mosaic.version = 11 : i64} {
  func.func @bpnet_kernel(%arg0: i32, %arg1: memref<1x128x4xf32, #tpu.memory_space<vmem>>, %arg2: memref<20x32xf32, #tpu.memory_space<vmem>>, %arg3: memref<1x32xf32, #tpu.memory_space<vmem>>, %arg4: memref<3x96x32xf32, #tpu.memory_space<vmem>>, %arg5: memref<3x32xf32, #tpu.memory_space<vmem>>, %arg6: memref<224x1xf32, #tpu.memory_space<vmem>>, %arg7: memref<1x1xf32, #tpu.memory_space<smem>>, %arg8: memref<32x1xf32, #tpu.memory_space<vmem>>, %arg9: memref<1x1xf32, #tpu.memory_space<smem>>, %arg10: memref<1x96x32xf32, #tpu.memory_space<vmem>>, %arg11: memref<1x64x1xf32, #tpu.memory_space<vmem>>, %arg12: memref<1x1x1xf32, #tpu.memory_space<vmem>>, %arg13: memref<124x32xf32, #tpu.memory_space<vmem>>) attributes {dimension_semantics = [#tpu.dimension_semantics<parallel>], iteration_bounds = array<i64: 2>, scalar_prefetch = 0 : i64, scratch_operands = 1 : i64, tpu.core_type = #tpu.core_type<tc>, window_params = [{transform_indices = @transform_0, window_bounds = array<i64: 1, 128, 4>}, {pipeline_mode = #tpu.pipeline_mode<synchronous>, transform_indices = @transform_1, window_bounds = array<i64: 20, 32>}, {pipeline_mode = #tpu.pipeline_mode<synchronous>, transform_indices = @transform_2, window_bounds = array<i64: 1, 32>}, {pipeline_mode = #tpu.pipeline_mode<synchronous>, transform_indices = @transform_3, window_bounds = array<i64: 3, 96, 32>}, {pipeline_mode = #tpu.pipeline_mode<synchronous>, transform_indices = @transform_4, window_bounds = array<i64: 3, 32>}, {pipeline_mode = #tpu.pipeline_mode<synchronous>, transform_indices = @transform_5, window_bounds = array<i64: 224, 1>}, {transform_indices = @transform_6, window_bounds = array<i64: 1, 1>}, {pipeline_mode = #tpu.pipeline_mode<synchronous>, transform_indices = @transform_7, window_bounds = array<i64: 32, 1>}, {transform_indices = @transform_8, window_bounds = array<i64: 1, 1>}, {transform_indices = @transform_9, window_bounds = array<i64: 1, 96, 32>}, {transform_indices = @transform_10, window_bounds = array<i64: 1, 64, 1>}, {transform_indices = @transform_11, window_bounds = array<i64: 1, 1, 1>}]} {
    %c0 = arith.constant 0 : index
    %c0_0 = arith.constant 0 : index
    %c0_1 = arith.constant 0 : index
    %0 = vector.load %arg1[%c0, %c0_0, %c0_1] : memref<1x128x4xf32, #tpu.memory_space<vmem>>, vector<1x128x4xf32>
    %1 = vector.shape_cast %0 : vector<1x128x4xf32> to vector<128x4xf32>
    %2 = vector.extract_strided_slice %1 {offsets = [0, 0], sizes = [124, 4], strides = [1, 1]} : vector<128x4xf32> to vector<124x4xf32>
    %3 = vector.extract_strided_slice %1 {offsets = [1, 0], sizes = [124, 4], strides = [1, 1]} : vector<128x4xf32> to vector<124x4xf32>
    %4 = vector.extract_strided_slice %1 {offsets = [2, 0], sizes = [124, 4], strides = [1, 1]} : vector<128x4xf32> to vector<124x4xf32>
    %5 = vector.extract_strided_slice %1 {offsets = [3, 0], sizes = [124, 4], strides = [1, 1]} : vector<128x4xf32> to vector<124x4xf32>
    %6 = vector.extract_strided_slice %1 {offsets = [4, 0], sizes = [124, 4], strides = [1, 1]} : vector<128x4xf32> to vector<124x4xf32>
    %7 = tpu.concatenate %2, %3, %4, %5, %6 in 1 : vector<124x4xf32>, vector<124x4xf32>, vector<124x4xf32>, vector<124x4xf32>, vector<124x4xf32> -> vector<124x20xf32>
    %c0_2 = arith.constant 0 : index
    %c0_3 = arith.constant 0 : index
    %8 = vector.load %arg2[%c0_2, %c0_3] : memref<20x32xf32, #tpu.memory_space<vmem>>, vector<20x32xf32>
    %cst = arith.constant dense<0.000000e+00> : vector<124x32xf32>
    %9 = tpu.matmul %7, %8, %cst {dimension_numbers = #tpu.dot_dimension_numbers<[1], [0], [0], [1], [0, 0, 1, 1], [], []>} : vector<124x20xf32>, vector<20x32xf32>, vector<124x32xf32> -> vector<124x32xf32>
    %c0_4 = arith.constant 0 : index
    %c0_5 = arith.constant 0 : index
    %10 = vector.load %arg3[%c0_4, %c0_5] : memref<1x32xf32, #tpu.memory_space<vmem>>, vector<1x32xf32>
    %11 = vector.broadcast %10 : vector<1x32xf32> to vector<124x32xf32>
    %12 = arith.addf %9, %11 : vector<124x32xf32>
    %cst_6 = arith.constant 0.000000e+00 : f32
    %13 = vector.broadcast %cst_6 : f32 to vector<124x32xf32>
    %14 = arith.maximumf %12, %13 : vector<124x32xf32>
    %c0_7 = arith.constant 0 : index
    %c0_8 = arith.constant 0 : index
    %15 = vector.load %arg13[%c0_7, %c0_8] : memref<124x32xf32, #tpu.memory_space<vmem>>, vector<124x32xf32>
    tpu.vector_store %arg13[%c0_7, %c0_8], %14 {strides = array<i32>} : memref<124x32xf32, #tpu.memory_space<vmem>>, vector<124x32xf32>,
    %c0_9 = arith.constant 0 : index
    %c0_10 = arith.constant 0 : index
    %16 = vector.load %arg13[%c0_9, %c0_10] : memref<124x32xf32, #tpu.memory_space<vmem>>, vector<120x32xf32>
    %c2 = arith.constant 2 : index
    %c0_11 = arith.constant 0 : index
    %17 = vector.load %arg13[%c2, %c0_11] : memref<124x32xf32, #tpu.memory_space<vmem>>, vector<120x32xf32>
    %c4 = arith.constant 4 : index
    %c0_12 = arith.constant 0 : index
    %18 = vector.load %arg13[%c4, %c0_12] : memref<124x32xf32, #tpu.memory_space<vmem>>, vector<120x32xf32>
    %19 = tpu.concatenate %16, %17, %18 in 1 : vector<120x32xf32>, vector<120x32xf32>, vector<120x32xf32> -> vector<120x96xf32>
    %c0_13 = arith.constant 0 : index
    %c0_14 = arith.constant 0 : index
    %c0_15 = arith.constant 0 : index
    %20 = vector.load %arg4[%c0_13, %c0_14, %c0_15] : memref<3x96x32xf32, #tpu.memory_space<vmem>>, vector<1x96x32xf32>
    %21 = vector.shape_cast %20 : vector<1x96x32xf32> to vector<96x32xf32>
    %cst_16 = arith.constant dense<0.000000e+00> : vector<120x32xf32>
    %22 = tpu.matmul %19, %21, %cst_16 {dimension_numbers = #tpu.dot_dimension_numbers<[1], [0], [0], [1], [0, 0, 1, 1], [], []>} : vector<120x96xf32>, vector<96x32xf32>, vector<120x32xf32> -> vector<120x32xf32>
    %c0_17 = arith.constant 0 : index
    %c0_18 = arith.constant 0 : index
    %23 = vector.load %arg5[%c0_17, %c0_18] : memref<3x32xf32, #tpu.memory_space<vmem>>, vector<1x32xf32>
    %24 = vector.shape_cast %23 : vector<1x32xf32> to vector<32xf32>
    %25 = vector.shape_cast %24 : vector<32xf32> to vector<1x32xf32>
    %26 = vector.broadcast %25 : vector<1x32xf32> to vector<120x32xf32>
    %27 = arith.addf %22, %26 : vector<120x32xf32>
    %cst_19 = arith.constant 0.000000e+00 : f32
    %28 = vector.broadcast %cst_19 : f32 to vector<120x32xf32>
    %29 = arith.maximumf %27, %28 : vector<120x32xf32>
    %c2_20 = arith.constant 2 : index
    %c0_21 = arith.constant 0 : index
    %30 = vector.load %arg13[%c2_20, %c0_21] : memref<124x32xf32, #tpu.memory_space<vmem>>, vector<120x32xf32>
    %31 = arith.addf %29, %30 : vector<120x32xf32>
    %c0_22 = arith.constant 0 : index
    %c0_23 = arith.constant 0 : index
    %32 = vector.load %arg13[%c0_22, %c0_23] : memref<124x32xf32, #tpu.memory_space<vmem>>, vector<120x32xf32>
    tpu.vector_store %arg13[%c0_22, %c0_23], %31 {strides = array<i32>} : memref<124x32xf32, #tpu.memory_space<vmem>>, vector<120x32xf32>,
    %c0_24 = arith.constant 0 : index
    %c0_25 = arith.constant 0 : index
    %33 = vector.load %arg13[%c0_24, %c0_25] : memref<124x32xf32, #tpu.memory_space<vmem>>, vector<112x32xf32>
    %c4_26 = arith.constant 4 : index
    %c0_27 = arith.constant 0 : index
    %34 = vector.load %arg13[%c4_26, %c0_27] : memref<124x32xf32, #tpu.memory_space<vmem>>, vector<112x32xf32>
    %c8 = arith.constant 8 : index
    %c0_28 = arith.constant 0 : index
    %35 = vector.load %arg13[%c8, %c0_28] : memref<124x32xf32, #tpu.memory_space<vmem>>, vector<112x32xf32>
    %36 = tpu.concatenate %33, %34, %35 in 1 : vector<112x32xf32>, vector<112x32xf32>, vector<112x32xf32> -> vector<112x96xf32>
    %c1 = arith.constant 1 : index
    %c0_29 = arith.constant 0 : index
    %c0_30 = arith.constant 0 : index
    %37 = vector.load %arg4[%c1, %c0_29, %c0_30] : memref<3x96x32xf32, #tpu.memory_space<vmem>>, vector<1x96x32xf32>
    %38 = vector.shape_cast %37 : vector<1x96x32xf32> to vector<96x32xf32>
    %cst_31 = arith.constant dense<0.000000e+00> : vector<112x32xf32>
    %39 = tpu.matmul %36, %38, %cst_31 {dimension_numbers = #tpu.dot_dimension_numbers<[1], [0], [0], [1], [0, 0, 1, 1], [], []>} : vector<112x96xf32>, vector<96x32xf32>, vector<112x32xf32> -> vector<112x32xf32>
    %c1_32 = arith.constant 1 : index
    %c0_33 = arith.constant 0 : index
    %40 = vector.load %arg5[%c1_32, %c0_33] : memref<3x32xf32, #tpu.memory_space<vmem>>, vector<1x32xf32>
    %41 = vector.shape_cast %40 : vector<1x32xf32> to vector<32xf32>
    %42 = vector.shape_cast %41 : vector<32xf32> to vector<1x32xf32>
    %43 = vector.broadcast %42 : vector<1x32xf32> to vector<112x32xf32>
    %44 = arith.addf %39, %43 : vector<112x32xf32>
    %cst_34 = arith.constant 0.000000e+00 : f32
    %45 = vector.broadcast %cst_34 : f32 to vector<112x32xf32>
    %46 = arith.maximumf %44, %45 : vector<112x32xf32>
    %c4_35 = arith.constant 4 : index
    %c0_36 = arith.constant 0 : index
    %47 = vector.load %arg13[%c4_35, %c0_36] : memref<124x32xf32, #tpu.memory_space<vmem>>, vector<112x32xf32>
    %48 = arith.addf %46, %47 : vector<112x32xf32>
    %c0_37 = arith.constant 0 : index
    %c0_38 = arith.constant 0 : index
    %49 = vector.load %arg13[%c0_37, %c0_38] : memref<124x32xf32, #tpu.memory_space<vmem>>, vector<112x32xf32>
    tpu.vector_store %arg13[%c0_37, %c0_38], %48 {strides = array<i32>} : memref<124x32xf32, #tpu.memory_space<vmem>>, vector<112x32xf32>,
    %c0_39 = arith.constant 0 : index
    %c0_40 = arith.constant 0 : index
    %50 = vector.load %arg13[%c0_39, %c0_40] : memref<124x32xf32, #tpu.memory_space<vmem>>, vector<96x32xf32>
    %c8_41 = arith.constant 8 : index
    %c0_42 = arith.constant 0 : index
    %51 = vector.load %arg13[%c8_41, %c0_42] : memref<124x32xf32, #tpu.memory_space<vmem>>, vector<96x32xf32>
    %c16 = arith.constant 16 : index
    %c0_43 = arith.constant 0 : index
    %52 = vector.load %arg13[%c16, %c0_43] : memref<124x32xf32, #tpu.memory_space<vmem>>, vector<96x32xf32>
    %53 = tpu.concatenate %50, %51, %52 in 1 : vector<96x32xf32>, vector<96x32xf32>, vector<96x32xf32> -> vector<96x96xf32>
    %c2_44 = arith.constant 2 : index
    %c0_45 = arith.constant 0 : index
    %c0_46 = arith.constant 0 : index
    %54 = vector.load %arg4[%c2_44, %c0_45, %c0_46] : memref<3x96x32xf32, #tpu.memory_space<vmem>>, vector<1x96x32xf32>
    %55 = vector.shape_cast %54 : vector<1x96x32xf32> to vector<96x32xf32>
    %cst_47 = arith.constant dense<0.000000e+00> : vector<96x32xf32>
    %56 = tpu.matmul %53, %55, %cst_47 {dimension_numbers = #tpu.dot_dimension_numbers<[1], [0], [0], [1], [0, 0, 1, 1], [], []>} : vector<96x96xf32>, vector<96x32xf32>, vector<96x32xf32> -> vector<96x32xf32>
    %c2_48 = arith.constant 2 : index
    %c0_49 = arith.constant 0 : index
    %57 = vector.load %arg5[%c2_48, %c0_49] : memref<3x32xf32, #tpu.memory_space<vmem>>, vector<1x32xf32>
    %58 = vector.shape_cast %57 : vector<1x32xf32> to vector<32xf32>
    %59 = vector.shape_cast %58 : vector<32xf32> to vector<1x32xf32>
    %60 = vector.broadcast %59 : vector<1x32xf32> to vector<96x32xf32>
    %61 = arith.addf %56, %60 : vector<96x32xf32>
    %cst_50 = arith.constant 0.000000e+00 : f32
    %62 = vector.broadcast %cst_50 : f32 to vector<96x32xf32>
    %63 = arith.maximumf %61, %62 : vector<96x32xf32>
    %c8_51 = arith.constant 8 : index
    %c0_52 = arith.constant 0 : index
    %64 = vector.load %arg13[%c8_51, %c0_52] : memref<124x32xf32, #tpu.memory_space<vmem>>, vector<96x32xf32>
    %65 = arith.addf %63, %64 : vector<96x32xf32>
    %c0_53 = arith.constant 0 : index
    %c0_54 = arith.constant 0 : index
    %66 = vector.load %arg13[%c0_53, %c0_54] : memref<124x32xf32, #tpu.memory_space<vmem>>, vector<96x32xf32>
    tpu.vector_store %arg13[%c0_53, %c0_54], %65 {strides = array<i32>} : memref<124x32xf32, #tpu.memory_space<vmem>>, vector<96x32xf32>,
    %c0_55 = arith.constant 0 : index
    %c0_56 = arith.constant 0 : index
    %c0_57 = arith.constant 0 : index
    %67 = vector.load %arg10[%c0_55, %c0_56, %c0_57] : memref<1x96x32xf32, #tpu.memory_space<vmem>>, vector<1x96x32xf32>
    %68 = vector.shape_cast %67 : vector<1x96x32xf32> to vector<96x32xf32>
    %69 = vector.shape_cast %65 : vector<96x32xf32> to vector<1x96x32xf32>
    tpu.vector_store %arg10[%c0_55, %c0_56, %c0_57], %69 {strides = array<i32>} : memref<1x96x32xf32, #tpu.memory_space<vmem>>, vector<1x96x32xf32>,
    %70 = vector.extract_strided_slice %65 {offsets = [13, 0], sizes = [64, 32], strides = [1, 1]} : vector<96x32xf32> to vector<64x32xf32>
    %71 = vector.extract_strided_slice %65 {offsets = [14, 0], sizes = [64, 32], strides = [1, 1]} : vector<96x32xf32> to vector<64x32xf32>
    %72 = vector.extract_strided_slice %65 {offsets = [15, 0], sizes = [64, 32], strides = [1, 1]} : vector<96x32xf32> to vector<64x32xf32>
    %73 = vector.extract_strided_slice %65 {offsets = [16, 0], sizes = [64, 32], strides = [1, 1]} : vector<96x32xf32> to vector<64x32xf32>
    %74 = vector.extract_strided_slice %65 {offsets = [17, 0], sizes = [64, 32], strides = [1, 1]} : vector<96x32xf32> to vector<64x32xf32>
    %75 = vector.extract_strided_slice %65 {offsets = [18, 0], sizes = [64, 32], strides = [1, 1]} : vector<96x32xf32> to vector<64x32xf32>
    %76 = vector.extract_strided_slice %65 {offsets = [19, 0], sizes = [64, 32], strides = [1, 1]} : vector<96x32xf32> to vector<64x32xf32>
    %77 = tpu.concatenate %70, %71, %72, %73, %74, %75, %76 in 1 : vector<64x32xf32>, vector<64x32xf32>, vector<64x32xf32>, vector<64x32xf32>, vector<64x32xf32>, vector<64x32xf32>, vector<64x32xf32> -> vector<64x224xf32>
    %c0_58 = arith.constant 0 : index
    %c0_59 = arith.constant 0 : index
    %78 = vector.load %arg6[%c0_58, %c0_59] : memref<224x1xf32, #tpu.memory_space<vmem>>, vector<224x1xf32>
    %cst_60 = arith.constant dense<0.000000e+00> : vector<64x1xf32>
    %79 = tpu.matmul %77, %78, %cst_60 {dimension_numbers = #tpu.dot_dimension_numbers<[1], [0], [0], [1], [0, 0, 1, 1], [], []>} : vector<64x224xf32>, vector<224x1xf32>, vector<64x1xf32> -> vector<64x1xf32>
    %c0_61 = arith.constant 0 : index
    %c0_62 = arith.constant 0 : index
    %80 = memref.load %arg7[%c0_61, %c0_62] : memref<1x1xf32, #tpu.memory_space<smem>>
    %81 = vector.broadcast %80 : f32 to vector<64x1xf32>
    %82 = arith.addf %79, %81 : vector<64x1xf32>
    %c0_63 = arith.constant 0 : index
    %c0_64 = arith.constant 0 : index
    %c0_65 = arith.constant 0 : index
    %83 = vector.load %arg11[%c0_63, %c0_64, %c0_65] : memref<1x64x1xf32, #tpu.memory_space<vmem>>, vector<1x64x1xf32>
    %84 = vector.shape_cast %83 : vector<1x64x1xf32> to vector<64x1xf32>
    %85 = vector.shape_cast %82 : vector<64x1xf32> to vector<1x64x1xf32>
    tpu.vector_store %arg11[%c0_63, %c0_64, %c0_65], %85 {strides = array<i32>} : memref<1x64x1xf32, #tpu.memory_space<vmem>>, vector<1x64x1xf32>,
    %cst_66 = arith.constant dense<0.000000e+00> : vector<32xf32>
    %86 = vector.multi_reduction <add>, %65, %cst_66 [0] : vector<96x32xf32> to vector<32xf32>
    %87 = vector.shape_cast %86 : vector<32xf32> to vector<1x32xf32>
    %cst_67 = arith.constant 9.600000e+01 : f32
    %88 = vector.broadcast %cst_67 : f32 to vector<1x32xf32>
    %89 = arith.divf %87, %88 : vector<1x32xf32>
    %c0_68 = arith.constant 0 : index
    %c0_69 = arith.constant 0 : index
    %90 = vector.load %arg8[%c0_68, %c0_69] : memref<32x1xf32, #tpu.memory_space<vmem>>, vector<32x1xf32>
    %cst_70 = arith.constant dense<0.000000e+00> : vector<1x1xf32>
    %91 = tpu.matmul %89, %90, %cst_70 {dimension_numbers = #tpu.dot_dimension_numbers<[1], [0], [0], [1], [0, 0, 1, 1], [], []>} : vector<1x32xf32>, vector<32x1xf32>, vector<1x1xf32> -> vector<1x1xf32>
    %c0_71 = arith.constant 0 : index
    %c0_72 = arith.constant 0 : index
    %92 = memref.load %arg9[%c0_71, %c0_72] : memref<1x1xf32, #tpu.memory_space<smem>>
    %93 = vector.broadcast %92 : f32 to vector<1x1xf32>
    %94 = arith.addf %91, %93 : vector<1x1xf32>
    %c0_73 = arith.constant 0 : index
    %c0_74 = arith.constant 0 : index
    %c0_75 = arith.constant 0 : index
    %95 = vector.load %arg12[%c0_73, %c0_74, %c0_75] : memref<1x1x1xf32, #tpu.memory_space<vmem>>, vector<1x1x1xf32>
    %96 = vector.shape_cast %95 : vector<1x1x1xf32> to vector<1x1xf32>
    %97 = vector.shape_cast %94 : vector<1x1xf32> to vector<1x1x1xf32>
    tpu.vector_store %arg12[%c0_73, %c0_74, %c0_75], %97 {strides = array<i32>} : memref<1x1x1xf32, #tpu.memory_space<vmem>>, vector<1x1x1xf32>,
    return
  }
  func.func @transform_0(%arg0: i32) -> (i32, i32, i32) {
    %c0_i32 = arith.constant 0 : i32
    %c0_i32_0 = arith.constant 0 : i32
    %c0_i32_1 = arith.constant 0 : i32
    return %arg0, %c0_i32, %c0_i32_0 : i32, i32, i32
  }
  func.func @transform_1(%arg0: i32) -> (i32, i32) {
    %c0_i32 = arith.constant 0 : i32
    %c0_i32_0 = arith.constant 0 : i32
    %c0_i32_1 = arith.constant 0 : i32
    return %c0_i32, %c0_i32_0 : i32, i32
  }
  func.func @transform_2(%arg0: i32) -> (i32, i32) {
    %c0_i32 = arith.constant 0 : i32
    %c0_i32_0 = arith.constant 0 : i32
    %c0_i32_1 = arith.constant 0 : i32
    return %c0_i32, %c0_i32_0 : i32, i32
  }
  func.func @transform_3(%arg0: i32) -> (i32, i32, i32) {
    %c0_i32 = arith.constant 0 : i32
    %c0_i32_0 = arith.constant 0 : i32
    %c0_i32_1 = arith.constant 0 : i32
    %c0_i32_2 = arith.constant 0 : i32
    return %c0_i32, %c0_i32_0, %c0_i32_1 : i32, i32, i32
  }
  func.func @transform_4(%arg0: i32) -> (i32, i32) {
    %c0_i32 = arith.constant 0 : i32
    %c0_i32_0 = arith.constant 0 : i32
    %c0_i32_1 = arith.constant 0 : i32
    return %c0_i32, %c0_i32_0 : i32, i32
  }
  func.func @transform_5(%arg0: i32) -> (i32, i32) {
    %c0_i32 = arith.constant 0 : i32
    %c0_i32_0 = arith.constant 0 : i32
    %c0_i32_1 = arith.constant 0 : i32
    return %c0_i32, %c0_i32_0 : i32, i32
  }
  func.func @transform_6(%arg0: i32) -> (i32, i32) {
    %c0_i32 = arith.constant 0 : i32
    %c0_i32_0 = arith.constant 0 : i32
    %c0_i32_1 = arith.constant 0 : i32
    return %c0_i32, %c0_i32_0 : i32, i32
  }
  func.func @transform_7(%arg0: i32) -> (i32, i32) {
    %c0_i32 = arith.constant 0 : i32
    %c0_i32_0 = arith.constant 0 : i32
    %c0_i32_1 = arith.constant 0 : i32
    return %c0_i32, %c0_i32_0 : i32, i32
  }
  func.func @transform_8(%arg0: i32) -> (i32, i32) {
    %c0_i32 = arith.constant 0 : i32
    %c0_i32_0 = arith.constant 0 : i32
    %c0_i32_1 = arith.constant 0 : i32
    return %c0_i32, %c0_i32_0 : i32, i32
  }
  func.func @transform_9(%arg0: i32) -> (i32, i32, i32) {
    %c0_i32 = arith.constant 0 : i32
    %c0_i32_0 = arith.constant 0 : i32
    %c0_i32_1 = arith.constant 0 : i32
    return %arg0, %c0_i32, %c0_i32_0 : i32, i32, i32
  }
  func.func @transform_10(%arg0: i32) -> (i32, i32, i32) {
    %c0_i32 = arith.constant 0 : i32
    %c0_i32_0 = arith.constant 0 : i32
    %c0_i32_1 = arith.constant 0 : i32
    return %arg0, %c0_i32, %c0_i32_0 : i32, i32, i32
  }
  func.func @transform_11(%arg0: i32) -> (i32, i32, i32) {
    %c0_i32 = arith.constant 0 : i32
    %c0_i32_0 = arith.constant 0 : i32
    %c0_i32_1 = arith.constant 0 : i32
    return %arg0, %c0_i32, %c0_i32_0 : i32, i32, i32
  }
}

</mosaic_0001>

<llo_original>
// kernel: tpu_custom_call.1
$region0: #{tpu_custom_call.1}
  #allocation0 [shape = 'u32[]', space=smem, size = 0x4, offset = 0x4, fixed_abs, tag = 'smem constant byte address 0x4 - core index']
  #allocation1 [shape = 'u32[72,128]{1,0:T(1,128)}', space=vmem, size = 0x9000, scoped, tag = 'internal scratch']
  #allocation2 [shape = 'f32[124,32]{1,0:T(8,128)}', space=vmem, size = 0x10000, scoped, tag = 'scratch operand']
  #allocation3 [shape = 'f32[1,1]{1,0:T(1,128)S(6)}', space=smem, size = 0x200, scoped, tag = 'scoped memory for tpu_custom_call.1']
  #allocation4 [shape = 'f32[1,1]{1,0:T(1,128)S(6)}', space=smem, size = 0x200, scoped, tag = 'scoped memory for tpu_custom_call.1']
  %s0 = inlined_call_operand.vmem [shape: f32[2,128,4], index: 0, kind: input, shape index: {}]
  %s1 = inlined_call_operand.vmem [shape: f32[20,32], index: 1, kind: input, shape index: {}]
  %s2 = inlined_call_operand.vmem [shape: f32[1,32], index: 2, kind: input, shape index: {}]
  %s3 = inlined_call_operand.vmem [shape: f32[3,96,32], index: 3, kind: input, shape index: {}]
  %s4 = inlined_call_operand.vmem [shape: f32[3,32], index: 4, kind: input, shape index: {}]
  %s5 = inlined_call_operand.vmem [shape: f32[224,1], index: 5, kind: input, shape index: {}]
  %s6 = inlined_call_operand.<no memory space> [shape: f32[1,1], index: 6, kind: input, shape index: {}]
  %s7 = inlined_call_operand.vmem [shape: f32[32,1], index: 7, kind: input, shape index: {}]
  %s8 = inlined_call_operand.<no memory space> [shape: f32[1,1], index: 8, kind: input, shape index: {}]
  %s9 = inlined_call_operand.vmem [shape: f32[2,96,32], index: 9, kind: output, shape index: {0}]
  %s10 = inlined_call_operand.vmem [shape: f32[2,64,1], index: 10, kind: output, shape index: {1}]
  %s11 = inlined_call_operand.vmem [shape: f32[2,1,1], index: 11, kind: output, shape index: {2}]
  %12 = xla_tuple %s9, %s10, %s11
  %s13 = sld [smem:[#allocation0]]
  $region85: #{tpu_custom_call.1} parent=0
    _
  %s15 = ssub.s32 1, %s13
  %s16 = scalar_select 0, %s15, %s13
  %17 = sst [smem:[#allocation3]] %s6
  %18 = sst [smem:[#allocation4]] %s8
  loop: start=0, step=1, limit=4
  $region2: #{tpu_custom_call.1} parent=0 // loop_pre_header
    _
  $region3: #{tpu_custom_call.1} parent=0 // loop_header
    %s20 = sphi 0, %s24
    %p21 = scmp.ge.s32.totalorder %s20, 4
    %s30 = sphi 0, %s32
    %s33 = sphi 0, %s30
    %s34 = sphi 0, %s33
    %s50 = sphi 0, %s34
    %s54 = sphi 0, %s54
    %s56 = sphi 0, %s54
    %s57 = sphi 0, %s56
    %s71 = sphi 0, %s57
    %s75 = sphi 0, %s75
    %s77 = sphi 0, %s75
    %s78 = sphi 0, %s77
    %s92 = sphi 0, %s78
    %s96 = sphi 0, %s96
    %s98 = sphi 0, %s96
    %s99 = sphi 0, %s98
    %s113 = sphi 0, %s99
    %s117 = sphi 0, %s117
    %s119 = sphi 0, %s117
    %s120 = sphi 0, %s119
    %s134 = sphi 0, %s120
    %s138 = sphi 0, %s138
    %s140 = sphi 0, %s138
    %s141 = sphi 0, %s140
    %s155 = sphi 0, %s141
    %s159 = sphi 0, %s159
    %s161 = sphi 0, %s159
    %s162 = sphi 0, %s161
    %s176 = sphi 0, %s162
    %s180 = sphi 0, %s180
    %s182 = sphi 0, %s180
    %s183 = sphi 0, %s182
    %s197 = sphi 0, %s183
    %s201 = sphi 0, %s201
    %s203 = sphi 0, %s201
    %s204 = sphi 0, %s203
    %s218 = sphi 0, %s204
    %s224 = sphi 0, %s226
    %s227 = sphi 0, %s224
    %s228 = sphi 0, %s227
    %s244 = sphi 0, %s228
    %s250 = sphi 0, %s252
    %s253 = sphi 0, %s250
    %s254 = sphi 0, %s253
    %s270 = sphi 0, %s254
    %s276 = sphi 0, %s278
    %s279 = sphi 0, %s276
    %s280 = sphi 0, %s279
    %s296 = sphi 0, %s280
  $region4: #{tpu_custom_call.1} parent=0 // loop_header_branch
    %23 = sbr.rel (%p21) target = $region8
  $region5: #{tpu_custom_call.1} parent=0 // loop_body
    %s25 = ssub.s32 %s20, 1
    %s26 = ssub.s32 %s20, 2
    %s27 = sadd.s32 %s20, 1
    %s28 = ssub.s32 %s20, %s27
    %p29 = scmp.eq.s32.totalorder %s28, 0
    %s31 = sadd.s32 %s30, 1
    %s32 = scalar_select %p29, %s30, %s31
    %p35 = pneg %p29
    %p36 = scmp.eq.s32.totalorder %s20, 1
    %p37 = por %p35, %p36
    %p38 = scmp.ne.s32.totalorder %s30, %s33
    %p39 = scmp.eq.s32.totalorder %s20, 0
    %p40 = por %p38, %p39
    %p41 = scmp.ne.s32.totalorder %s30, %s33
    %p42 = scmp.eq.s32.totalorder %s25, 1
    %p43 = por %p41, %p42
    %p44 = scmp.ne.s32.totalorder %s33, %s34
    %p45 = scmp.eq.s32.totalorder %s25, 0
    %p46 = por %p44, %p45
    %p47 = scmp.ne.s32.totalorder %s33, %s34
    %p48 = scmp.eq.s32.totalorder %s26, 1
    %p49 = por %p47, %p48
    %p51 = scmp.ne.s32.totalorder %s34, %s50
    %p52 = scmp.eq.s32.totalorder %s26, 0
    %p53 = por %p51, %p52
    %s55 = sadd.s32 %s54, 1
    %p58 = scmp.eq.s32.totalorder %s20, 1
    %p59 = scmp.ne.s32.totalorder %s54, %s56
    %p60 = scmp.eq.s32.totalorder %s20, 0
    %p61 = por %p59, %p60
    %p62 = scmp.ne.s32.totalorder %s54, %s56
    %p63 = scmp.eq.s32.totalorder %s25, 1
    %p64 = por %p62, %p63
    %p65 = scmp.ne.s32.totalorder %s56, %s57
    %p66 = scmp.eq.s32.totalorder %s25, 0
    %p67 = por %p65, %p66
    %p68 = scmp.ne.s32.totalorder %s56, %s57
    %p69 = scmp.eq.s32.totalorder %s26, 1
    %p70 = por %p68, %p69
    %p72 = scmp.ne.s32.totalorder %s57, %s71
    %p73 = scmp.eq.s32.totalorder %s26, 0
    %p74 = por %p72, %p73
    %s76 = sadd.s32 %s75, 1
    %p79 = scmp.eq.s32.totalorder %s20, 1
    %p80 = scmp.ne.s32.totalorder %s75, %s77
    %p81 = scmp.eq.s32.totalorder %s20, 0
    %p82 = por %p80, %p81
    %p83 = scmp.ne.s32.totalorder %s75, %s77
    %p84 = scmp.eq.s32.totalorder %s25, 1
    %p85 = por %p83, %p84
    %p86 = scmp.ne.s32.totalorder %s77, %s78
    %p87 = scmp.eq.s32.totalorder %s25, 0
    %p88 = por %p86, %p87
    %p89 = scmp.ne.s32.totalorder %s77, %s78
    %p90 = scmp.eq.s32.totalorder %s26, 1
    %p91 = por %p89, %p90
    %p93 = scmp.ne.s32.totalorder %s78, %s92
    %p94 = scmp.eq.s32.totalorder %s26, 0
    %p95 = por %p93, %p94
    %s97 = sadd.s32 %s96, 1
    %p100 = scmp.eq.s32.totalorder %s20, 1
    %p101 = scmp.ne.s32.totalorder %s96, %s98
    %p102 = scmp.eq.s32.totalorder %s20, 0
    %p103 = por %p101, %p102
    %p104 = scmp.ne.s32.totalorder %s96, %s98
    %p105 = scmp.eq.s32.totalorder %s25, 1
    %p106 = por %p104, %p105
    %p107 = scmp.ne.s32.totalorder %s98, %s99
    %p108 = scmp.eq.s32.totalorder %s25, 0
    %p109 = por %p107, %p108
    %p110 = scmp.ne.s32.totalorder %s98, %s99
    %p111 = scmp.eq.s32.totalorder %s26, 1
    %p112 = por %p110, %p111
    %p114 = scmp.ne.s32.totalorder %s99, %s113
    %p115 = scmp.eq.s32.totalorder %s26, 0
    %p116 = por %p114, %p115
    %s118 = sadd.s32 %s117, 1
    %p121 = scmp.eq.s32.totalorder %s20, 1
    %p122 = scmp.ne.s32.totalorder %s117, %s119
    %p123 = scmp.eq.s32.totalorder %s20, 0
    %p124 = por %p122, %p123
    %p125 = scmp.ne.s32.totalorder %s117, %s119
    %p126 = scmp.eq.s32.totalorder %s25, 1
    %p127 = por %p125, %p126
    %p128 = scmp.ne.s32.totalorder %s119, %s120
    %p129 = scmp.eq.s32.totalorder %s25, 0
    %p130 = por %p128, %p129
    %p131 = scmp.ne.s32.totalorder %s119, %s120
    %p132 = scmp.eq.s32.totalorder %s26, 1
    %p133 = por %p131, %p132
    %p135 = scmp.ne.s32.totalorder %s120, %s134
    %p136 = scmp.eq.s32.totalorder %s26, 0
    %p137 = por %p135, %p136
    %s139 = sadd.s32 %s138, 1
    %p142 = scmp.eq.s32.totalorder %s20, 1
    %p143 = scmp.ne.s32.totalorder %s138, %s140
    %p144 = scmp.eq.s32.totalorder %s20, 0
    %p145 = por %p143, %p144
    %p146 = scmp.ne.s32.totalorder %s138, %s140
    %p147 = scmp.eq.s32.totalorder %s25, 1
    %p148 = por %p146, %p147
    %p149 = scmp.ne.s32.totalorder %s140, %s141
    %p150 = scmp.eq.s32.totalorder %s25, 0
    %p151 = por %p149, %p150
    %p152 = scmp.ne.s32.totalorder %s140, %s141
    %p153 = scmp.eq.s32.totalorder %s26, 1
    %p154 = por %p152, %p153
    %p156 = scmp.ne.s32.totalorder %s141, %s155
    %p157 = scmp.eq.s32.totalorder %s26, 0
    %p158 = por %p156, %p157
    %s160 = sadd.s32 %s159, 1
    %p163 = scmp.eq.s32.totalorder %s20, 1
    %p164 = scmp.ne.s32.totalorder %s159, %s161
    %p165 = scmp.eq.s32.totalorder %s20, 0
    %p166 = por %p164, %p165
    %p167 = scmp.ne.s32.totalorder %s159, %s161
    %p168 = scmp.eq.s32.totalorder %s25, 1
    %p169 = por %p167, %p168
    %p170 = scmp.ne.s32.totalorder %s161, %s162
    %p171 = scmp.eq.s32.totalorder %s25, 0
    %p172 = por %p170, %p171
    %p173 = scmp.ne.s32.totalorder %s161, %s162
    %p174 = scmp.eq.s32.totalorder %s26, 1
    %p175 = por %p173, %p174
    %p177 = scmp.ne.s32.totalorder %s162, %s176
    %p178 = scmp.eq.s32.totalorder %s26, 0
    %p179 = por %p177, %p178
    %s181 = sadd.s32 %s180, 1
    %p184 = scmp.eq.s32.totalorder %s20, 1
    %p185 = scmp.ne.s32.totalorder %s180, %s182
    %p186 = scmp.eq.s32.totalorder %s20, 0
    %p187 = por %p185, %p186
    %p188 = scmp.ne.s32.totalorder %s180, %s182
    %p189 = scmp.eq.s32.totalorder %s25, 1
    %p190 = por %p188, %p189
    %p191 = scmp.ne.s32.totalorder %s182, %s183
    %p192 = scmp.eq.s32.totalorder %s25, 0
    %p193 = por %p191, %p192
    %p194 = scmp.ne.s32.totalorder %s182, %s183
    %p195 = scmp.eq.s32.totalorder %s26, 1
    %p196 = por %p194, %p195
    %p198 = scmp.ne.s32.totalorder %s183, %s197
    %p199 = scmp.eq.s32.totalorder %s26, 0
    %p200 = por %p198, %p199
    %s202 = sadd.s32 %s201, 1
    %p205 = scmp.eq.s32.totalorder %s20, 1
    %p206 = scmp.ne.s32.totalorder %s201, %s203
    %p207 = scmp.eq.s32.totalorder %s20, 0
    %p208 = por %p206, %p207
    %p209 = scmp.ne.s32.totalorder %s201, %s203
    %p210 = scmp.eq.s32.totalorder %s25, 1
    %p211 = por %p209, %p210
    %p212 = scmp.ne.s32.totalorder %s203, %s204
    %p213 = scmp.eq.s32.totalorder %s25, 0
    %p214 = por %p212, %p213
    %p215 = scmp.ne.s32.totalorder %s203, %s204
    %p216 = scmp.eq.s32.totalorder %s26, 1
    %p217 = por %p215, %p216
    %p219 = scmp.ne.s32.totalorder %s204, %s218
    %p220 = scmp.eq.s32.totalorder %s26, 0
    %p221 = por %p219, %p220
    %s222 = ssub.s32 %s20, %s27
    %p223 = scmp.eq.s32.totalorder %s222, 0
    %s225 = sadd.s32 %s224, 1
    %s226 = scalar_select %p223, %s224, %s225
    %p229 = pneg %p223
    %p230 = scmp.eq.s32.totalorder %s20, 1
    %p231 = por %p229, %p230
    %p232 = scmp.ne.s32.totalorder %s224, %s227
    %p233 = scmp.eq.s32.totalorder %s20, 0
    %p234 = por %p232, %p233
    %p235 = scmp.ne.s32.totalorder %s224, %s227
    %p236 = scmp.eq.s32.totalorder %s25, 1
    %p237 = por %p235, %p236
    %p238 = scmp.ne.s32.totalorder %s227, %s228
    %p239 = scmp.eq.s32.totalorder %s25, 0
    %p240 = por %p238, %p239
    %p241 = scmp.ne.s32.totalorder %s227, %s228
    %p242 = scmp.eq.s32.totalorder %s26, 1
    %p243 = por %p241, %p242
    %p245 = scmp.ne.s32.totalorder %s228, %s244
    %p246 = scmp.eq.s32.totalorder %s26, 0
    %p247 = por %p245, %p246
    %s248 = ssub.s32 %s20, %s27
    %p249 = scmp.eq.s32.totalorder %s248, 0
    %s251 = sadd.s32 %s250, 1
    %s252 = scalar_select %p249, %s250, %s251
    %p255 = pneg %p249
    %p256 = scmp.eq.s32.totalorder %s20, 1
    %p257 = por %p255, %p256
    %p258 = scmp.ne.s32.totalorder %s250, %s253
    %p259 = scmp.eq.s32.totalorder %s20, 0
    %p260 = por %p258, %p259
    %p261 = scmp.ne.s32.totalorder %s250, %s253
    %p262 = scmp.eq.s32.totalorder %s25, 1
    %p263 = por %p261, %p262
    %p264 = scmp.ne.s32.totalorder %s253, %s254
    %p265 = scmp.eq.s32.totalorder %s25, 0
    %p266 = por %p264, %p265
    %p267 = scmp.ne.s32.totalorder %s253, %s254
    %p268 = scmp.eq.s32.totalorder %s26, 1
    %p269 = por %p267, %p268
    %p271 = scmp.ne.s32.totalorder %s254, %s270
    %p272 = scmp.eq.s32.totalorder %s26, 0
    %p273 = por %p271, %p272
    %s274 = ssub.s32 %s20, %s27
    %p275 = scmp.eq.s32.totalorder %s274, 0
    %s277 = sadd.s32 %s276, 1
    %s278 = scalar_select %p275, %s276, %s277
    %p281 = pneg %p275
    %p282 = scmp.eq.s32.totalorder %s20, 1
    %p283 = por %p281, %p282
    %p284 = scmp.ne.s32.totalorder %s276, %s279
    %p285 = scmp.eq.s32.totalorder %s20, 0
    %p286 = por %p284, %p285
    %p287 = scmp.ne.s32.totalorder %s276, %s279
    %p288 = scmp.eq.s32.totalorder %s25, 1
    %p289 = por %p287, %p288
    %p290 = scmp.ne.s32.totalorder %s279, %s280
    %p291 = scmp.eq.s32.totalorder %s25, 0
    %p292 = por %p290, %p291
    %p293 = scmp.ne.s32.totalorder %s279, %s280
    %p294 = scmp.eq.s32.totalorder %s26, 1
    %p295 = por %p293, %p294
    %p297 = scmp.ne.s32.totalorder %s280, %s296
    %p298 = scmp.eq.s32.totalorder %s26, 0
    %p299 = por %p297, %p298
    %p300 = scmp.le.s32.totalorder 1, %s20
    %p301 = scmp.lt.s32.totalorder %s20, 3
    %p302 = pnand %p300, %p301
    %p303 = pneg %p302
    // Predicated region
    $region9: #{tpu_custom_call.1} parent=5 // pred_check
      _
    $region10: #{tpu_custom_call.1} parent=5 // pred_check_branch
      %305 = sbr.rel (%p302) target = $region12
    $region11: #{tpu_custom_call.1} parent=5 // pred_region
      %s306 = ssub.s32 %s20, 1
      // Predicated region
      $region13: #{tpu_custom_call.1} parent=11 // pred_check
        %p307 = pneg %p67
      $region14: #{tpu_custom_call.1} parent=11 // pred_check_branch
        %309 = sbr.rel (%p307) target = $region16
      $region15: #{tpu_custom_call.1} parent=11 // pred_region
        _
      $region16: #{tpu_custom_call.1} parent=11 // pred_fallthru
        _
      // Predicated region
      $region17: #{tpu_custom_call.1} parent=11 // pred_check
        %p310 = pneg %p88
      $region18: #{tpu_custom_call.1} parent=11 // pred_check_branch
        %312 = sbr.rel (%p310) target = $region20
      $region19: #{tpu_custom_call.1} parent=11 // pred_region
        _
      $region20: #{tpu_custom_call.1} parent=11 // pred_fallthru
        _
      // Predicated region
      $region21: #{tpu_custom_call.1} parent=11 // pred_check
        %p313 = pneg %p109
      $region22: #{tpu_custom_call.1} parent=11 // pred_check_branch
        %315 = sbr.rel (%p313) target = $region24
      $region23: #{tpu_custom_call.1} parent=11 // pred_region
        _
      $region24: #{tpu_custom_call.1} parent=11 // pred_fallthru
        _
      // Predicated region
      $region25: #{tpu_custom_call.1} parent=11 // pred_check
        %p316 = pneg %p130
      $region26: #{tpu_custom_call.1} parent=11 // pred_check_branch
        %318 = sbr.rel (%p316) target = $region28
      $region27: #{tpu_custom_call.1} parent=11 // pred_region
        _
      $region28: #{tpu_custom_call.1} parent=11 // pred_fallthru
        _
      // Predicated region
      $region29: #{tpu_custom_call.1} parent=11 // pred_check
        %p319 = pneg %p151
      $region30: #{tpu_custom_call.1} parent=11 // pred_check_branch
        %321 = sbr.rel (%p319) target = $region32
      $region31: #{tpu_custom_call.1} parent=11 // pred_region
        _
      $region32: #{tpu_custom_call.1} parent=11 // pred_fallthru
        _
      // Predicated region
      $region33: #{tpu_custom_call.1} parent=11 // pred_check
        %p322 = pneg %p172
      $region34: #{tpu_custom_call.1} parent=11 // pred_check_branch
        %324 = sbr.rel (%p322) target = $region36
      $region35: #{tpu_custom_call.1} parent=11 // pred_region
        _
      $region36: #{tpu_custom_call.1} parent=11 // pred_fallthru
        _
      // Predicated region
      $region37: #{tpu_custom_call.1} parent=11 // pred_check
        %p325 = pneg %p193
      $region38: #{tpu_custom_call.1} parent=11 // pred_check_branch
        %327 = sbr.rel (%p325) target = $region40
      $region39: #{tpu_custom_call.1} parent=11 // pred_region
        _
      $region40: #{tpu_custom_call.1} parent=11 // pred_fallthru
        _
      // Predicated region
      $region41: #{tpu_custom_call.1} parent=11 // pred_check
        %p328 = pneg %p214
      $region42: #{tpu_custom_call.1} parent=11 // pred_check_branch
        %330 = sbr.rel (%p328) target = $region44
      $region43: #{tpu_custom_call.1} parent=11 // pred_region
        _
      $region44: #{tpu_custom_call.1} parent=11 // pred_fallthru
        _
    $region12: #{tpu_custom_call.1} parent=5 // pred_fallthru
      _
    %p331 = scmp.lt.s32.totalorder %s20, 2
    // Predicated region
    $region45: #{tpu_custom_call.1} parent=5 // pred_check
      %p332 = pneg %p331
    $region46: #{tpu_custom_call.1} parent=5 // pred_check_branch
      %334 = sbr.rel (%p332) target = $region48
    $region47: #{tpu_custom_call.1} parent=5 // pred_region
      // Predicated region
      $region49: #{tpu_custom_call.1} parent=47 // pred_check
        %p335 = pneg %p40
      $region50: #{tpu_custom_call.1} parent=47 // pred_check_branch
        %337 = sbr.rel (%p335) target = $region52
      $region51: #{tpu_custom_call.1} parent=47 // pred_region
        %p338 = scmp.lt.s32.totalorder %s20, 1
        %s339 = scalar_select %p338, %s20, 1
        %s340 = smul.addr %s339, 16
        %s341 = smul.addr %s340, 8
        %s342 = scalar_lea.vmem %s0, %s341
      $region52: #{tpu_custom_call.1} parent=47 // pred_fallthru
        _
    $region48: #{tpu_custom_call.1} parent=5 // pred_fallthru
      _
    %p343 = scmp.le.s32.totalorder 1, %s20
    %p344 = scmp.lt.s32.totalorder %s20, 3
    %p345 = pnand %p343, %p344
    %p346 = pneg %p345
    // Predicated region
    $region53: #{tpu_custom_call.1} parent=5 // pred_check
      _
    $region54: #{tpu_custom_call.1} parent=5 // pred_check_branch
      %348 = sbr.rel (%p345) target = $region56
    $region55: #{tpu_custom_call.1} parent=5 // pred_region
      %s349 = ssub.s32 %s20, 1
      %p350 = scmp.lt.s32.totalorder %s25, 1
      %s351 = scalar_select %p350, %s25, 1
      %s352 = smul.addr %s351, 16
      %s353 = smul.addr %s352, 8
      %s354 = scalar_lea.vmem %s0, %s353
      %p355 = pneg %p46
      %p356 = pneg %p43
      %p357 = pneg %p67
      %p358 = pneg %p64
      %p359 = pneg %p88
      %p360 = pneg %p85
      %p361 = pneg %p109
      %p362 = pneg %p106
      %p363 = pneg %p130
      %p364 = pneg %p127
      %p365 = pneg %p151
      %p366 = pneg %p148
      %p367 = pneg %p172
      %p368 = pneg %p169
      %p369 = pneg %p193
      %p370 = pneg %p190
      %p371 = pneg %p214
      %p372 = pneg %p211
      %p373 = pneg %p240
      %p374 = pneg %p237
      %p375 = scmp.lt.s32.totalorder %s25, 1
      %s376 = scalar_select %p375, %s25, 1
      %s377 = smul.addr %s376, 12
      %s378 = smul.addr %s377, 8
      %s379 = scalar_lea.vmem %s9, %s378
      %p380 = pneg %p266
      %p381 = pneg %p263
      %p382 = scmp.lt.s32.totalorder %s25, 1
      %s383 = scalar_select %p382, %s25, 1
      %s384 = smul.addr %s383, 8
      %s385 = smul.addr %s384, 8
      %s386 = scalar_lea.vmem %s10, %s385
      %p387 = pneg %p292
      %p388 = pneg %p289
      %p389 = scmp.lt.s32.totalorder %s25, 1
      %s390 = scalar_select %p389, %s25, 1
      %s391 = scalar_lea.vmem %s11, %s390
      %p392 = scmp.lt.s32.totalorder %s25, 1
      %s393 = scalar_select %p392, %s25, 1
      %s394 = smul.addr %s393, 16
      %s395 = smul.addr %s394, 8
      %s396 = scalar_lea.vmem %s0, %s395
      %p397 = scmp.lt.s32.totalorder %s25, 1
      %s398 = scalar_select %p397, %s25, 1
      %s399 = smul.addr %s398, 12
      %s400 = smul.addr %s399, 8
      %s401 = scalar_lea.vmem %s9, %s400
      %p402 = scmp.lt.s32.totalorder %s25, 1
      %s403 = scalar_select %p402, %s25, 1
      %s404 = smul.addr %s403, 8
      %s405 = smul.addr %s404, 8
      %s406 = scalar_lea.vmem %s10, %s405
      %p407 = scmp.lt.s32.totalorder %s25, 1
      %s408 = scalar_select %p407, %s25, 1
      %s409 = scalar_lea.vmem %s11, %s408
      %v410 = vld [vmem:[%s396] sm:$0xff]
      %v411 = vld [vmem:[%s396 + $0x8] sm:$0xff]
      %v412 = vld [vmem:[%s396 + $0x10] sm:$0xff]
      %v413 = vld [vmem:[%s396 + $0x18] sm:$0xff]
      %v414 = vld [vmem:[%s396 + $0x20] sm:$0xff]
      %v415 = vld [vmem:[%s396 + $0x28] sm:$0xff]
      %v416 = vld [vmem:[%s396 + $0x30] sm:$0xff]
      %v417 = vld [vmem:[%s396 + $0x38] sm:$0xff]
      %v418 = vld [vmem:[%s396 + $0x40] sm:$0xff]
      %v419 = vld [vmem:[%s396 + $0x48] sm:$0xff]
      %v420 = vld [vmem:[%s396 + $0x50] sm:$0xff]
      %v421 = vld [vmem:[%s396 + $0x58] sm:$0xff]
      %v422 = vld [vmem:[%s396 + $0x60] sm:$0xff]
      %v423 = vld [vmem:[%s396 + $0x68] sm:$0xff]
      %v424 = vld [vmem:[%s396 + $0x70] sm:$0xff]
      %v425 = vld [vmem:[%s396 + $0x78] sm:$0xff]
      %vm442 = vcmask 1046528
      %v443 = vrot.slane %v410, 1
      %v444 = vrot.slane %v411, 1
      %v445 = vsel %vm442, %v443, %v444
      %v446 = vrot.slane %v412, 1
      %v447 = vsel %vm442, %v444, %v446
      %v448 = vrot.slane %v413, 1
      %v449 = vsel %vm442, %v446, %v448
      %v450 = vrot.slane %v414, 1
      %v451 = vsel %vm442, %v448, %v450
      %v452 = vrot.slane %v415, 1
      %v453 = vsel %vm442, %v450, %v452
      %v454 = vrot.slane %v416, 1
      %v455 = vsel %vm442, %v452, %v454
      %v456 = vrot.slane %v417, 1
      %v457 = vsel %vm442, %v454, %v456
      %v458 = vrot.slane %v418, 1
      %v459 = vsel %vm442, %v456, %v458
      %v460 = vrot.slane %v419, 1
      %v461 = vsel %vm442, %v458, %v460
      %v462 = vrot.slane %v420, 1
      %v463 = vsel %vm442, %v460, %v462
      %v464 = vrot.slane %v421, 1
      %v465 = vsel %vm442, %v462, %v464
      %v466 = vrot.slane %v422, 1
      %v467 = vsel %vm442, %v464, %v466
      %v468 = vrot.slane %v423, 1
      %v469 = vsel %vm442, %v466, %v468
      %v470 = vrot.slane %v424, 1
      %v471 = vsel %vm442, %v468, %v470
      %v472 = vrot.slane %v425, 1
      %v473 = vsel %vm442, %v470, %v472
      %474 = vrot.lane.b32.xlu0 %v445, 4
      %v475 = vpop.permute.xlu0 %474
      %476 = vrot.lane.b32.xlu0 %v447, 4
      %v477 = vpop.permute.xlu0 %476
      %478 = vrot.lane.b32.xlu0 %v449, 4
      %v479 = vpop.permute.xlu0 %478
      %480 = vrot.lane.b32.xlu0 %v451, 4
      %v481 = vpop.permute.xlu0 %480
      %482 = vrot.lane.b32.xlu0 %v453, 4
      %v483 = vpop.permute.xlu0 %482
      %484 = vrot.lane.b32.xlu0 %v455, 4
      %v485 = vpop.permute.xlu0 %484
      %486 = vrot.lane.b32.xlu0 %v457, 4
      %v487 = vpop.permute.xlu0 %486
      %488 = vrot.lane.b32.xlu0 %v459, 4
      %v489 = vpop.permute.xlu0 %488
      %490 = vrot.lane.b32.xlu0 %v461, 4
      %v491 = vpop.permute.xlu0 %490
      %492 = vrot.lane.b32.xlu0 %v463, 4
      %v493 = vpop.permute.xlu0 %492
      %494 = vrot.lane.b32.xlu0 %v465, 4
      %v495 = vpop.permute.xlu0 %494
      %496 = vrot.lane.b32.xlu0 %v467, 4
      %v497 = vpop.permute.xlu0 %496
      %498 = vrot.lane.b32.xlu0 %v469, 4
      %v499 = vpop.permute.xlu0 %498
      %500 = vrot.lane.b32.xlu0 %v471, 4
      %v501 = vpop.permute.xlu0 %500
      %502 = vrot.lane.b32.xlu0 %v473, 4
      %v503 = vpop.permute.xlu0 %502
      %504 = vrot.lane.b32.xlu0 %v472, 4
      %v505 = vpop.permute.xlu0 %504
      %vm522 = vcmask 1045504
      %v523 = vrot.slane %v410, 2
      %v524 = vrot.slane %v411, 2
      %v525 = vsel %vm522, %v523, %v524
      %v526 = vrot.slane %v412, 2
      %v527 = vsel %vm522, %v524, %v526
      %v528 = vrot.slane %v413, 2
      %v529 = vsel %vm522, %v526, %v528
      %v530 = vrot.slane %v414, 2
      %v531 = vsel %vm522, %v528, %v530
      %v532 = vrot.slane %v415, 2
      %v533 = vsel %vm522, %v530, %v532
      %v534 = vrot.slane %v416, 2
      %v535 = vsel %vm522, %v532, %v534
      %v536 = vrot.slane %v417, 2
      %v537 = vsel %vm522, %v534, %v536
      %v538 = vrot.slane %v418, 2
      %v539 = vsel %vm522, %v536, %v538
      %v540 = vrot.slane %v419, 2
      %v541 = vsel %vm522, %v538, %v540
      %v542 = vrot.slane %v420, 2
      %v543 = vsel %vm522, %v540, %v542
      %v544 = vrot.slane %v421, 2
      %v545 = vsel %vm522, %v542, %v544
      %v546 = vrot.slane %v422, 2
      %v547 = vsel %vm522, %v544, %v546
      %v548 = vrot.slane %v423, 2
      %v549 = vsel %vm522, %v546, %v548
      %v550 = vrot.slane %v424, 2
      %v551 = vsel %vm522, %v548, %v550
      %v552 = vrot.slane %v425, 2
      %v553 = vsel %vm522, %v550, %v552
      %554 = vrot.lane.b32.xlu0 %v525, 8
      %v555 = vpop.permute.xlu0 %554
      %556 = vrot.lane.b32.xlu0 %v527, 8
      %v557 = vpop.permute.xlu0 %556
      %558 = vrot.lane.b32.xlu0 %v529, 8
      %v559 = vpop.permute.xlu0 %558
      %560 = vrot.lane.b32.xlu0 %v531, 8
      %v561 = vpop.permute.xlu0 %560
      %562 = vrot.lane.b32.xlu0 %v533, 8
      %v563 = vpop.permute.xlu0 %562
      %564 = vrot.lane.b32.xlu0 %v535, 8
      %v565 = vpop.permute.xlu0 %564
      %566 = vrot.lane.b32.xlu0 %v537, 8
      %v567 = vpop.permute.xlu0 %566
      %568 = vrot.lane.b32.xlu0 %v539, 8
      %v569 = vpop.permute.xlu0 %568
      %570 = vrot.lane.b32.xlu0 %v541, 8
      %v571 = vpop.permute.xlu0 %570
      %572 = vrot.lane.b32.xlu0 %v543, 8
      %v573 = vpop.permute.xlu0 %572
      %574 = vrot.lane.b32.xlu0 %v545, 8
      %v575 = vpop.permute.xlu0 %574
      %576 = vrot.lane.b32.xlu0 %v547, 8
      %v577 = vpop.permute.xlu0 %576
      %578 = vrot.lane.b32.xlu0 %v549, 8
      %v579 = vpop.permute.xlu0 %578
      %580 = vrot.lane.b32.xlu0 %v551, 8
      %v581 = vpop.permute.xlu0 %580
      %582 = vrot.lane.b32.xlu0 %v553, 8
      %v583 = vpop.permute.xlu0 %582
      %584 = vrot.lane.b32.xlu0 %v552, 8
      %v585 = vpop.permute.xlu0 %584
      %vm602 = vcmask 1044480
      %v603 = vrot.slane %v410, 3
      %v604 = vrot.slane %v411, 3
      %v605 = vsel %vm602, %v603, %v604
      %v606 = vrot.slane %v412, 3
      %v607 = vsel %vm602, %v604, %v606
      %v608 = vrot.slane %v413, 3
      %v609 = vsel %vm602, %v606, %v608
      %v610 = vrot.slane %v414, 3
      %v611 = vsel %vm602, %v608, %v610
      %v612 = vrot.slane %v415, 3
      %v613 = vsel %vm602, %v610, %v612
      %v614 = vrot.slane %v416, 3
      %v615 = vsel %vm602, %v612, %v614
      %v616 = vrot.slane %v417, 3
      %v617 = vsel %vm602, %v614, %v616
      %v618 = vrot.slane %v418, 3
      %v619 = vsel %vm602, %v616, %v618
      %v620 = vrot.slane %v419, 3
      %v621 = vsel %vm602, %v618, %v620
      %v622 = vrot.slane %v420, 3
      %v623 = vsel %vm602, %v620, %v622
      %v624 = vrot.slane %v421, 3
      %v625 = vsel %vm602, %v622, %v624
      %v626 = vrot.slane %v422, 3
      %v627 = vsel %vm602, %v624, %v626
      %v628 = vrot.slane %v423, 3
      %v629 = vsel %vm602, %v626, %v628
      %v630 = vrot.slane %v424, 3
      %v631 = vsel %vm602, %v628, %v630
      %v632 = vrot.slane %v425, 3
      %v633 = vsel %vm602, %v630, %v632
      %634 = vrot.lane.b32.xlu0 %v605, 12
      %v635 = vpop.permute.xlu0 %634
      %636 = vrot.lane.b32.xlu0 %v607, 12
      %v637 = vpop.permute.xlu0 %636
      %638 = vrot.lane.b32.xlu0 %v609, 12
      %v639 = vpop.permute.xlu0 %638
      %640 = vrot.lane.b32.xlu0 %v611, 12
      %v641 = vpop.permute.xlu0 %640
      %642 = vrot.lane.b32.xlu0 %v613, 12
      %v643 = vpop.permute.xlu0 %642
      %644 = vrot.lane.b32.xlu0 %v615, 12
      %v645 = vpop.permute.xlu0 %644
      %646 = vrot.lane.b32.xlu0 %v617, 12
      %v647 = vpop.permute.xlu0 %646
      %648 = vrot.lane.b32.xlu0 %v619, 12
      %v649 = vpop.permute.xlu0 %648
      %650 = vrot.lane.b32.xlu0 %v621, 12
      %v651 = vpop.permute.xlu0 %650
      %652 = vrot.lane.b32.xlu0 %v623, 12
      %v653 = vpop.permute.xlu0 %652
      %654 = vrot.lane.b32.xlu0 %v625, 12
      %v655 = vpop.permute.xlu0 %654
      %656 = vrot.lane.b32.xlu0 %v627, 12
      %v657 = vpop.permute.xlu0 %656
      %658 = vrot.lane.b32.xlu0 %v629, 12
      %v659 = vpop.permute.xlu0 %658
      %660 = vrot.lane.b32.xlu0 %v631, 12
      %v661 = vpop.permute.xlu0 %660
      %662 = vrot.lane.b32.xlu0 %v633, 12
      %v663 = vpop.permute.xlu0 %662
      %664 = vrot.lane.b32.xlu0 %v632, 12
      %v665 = vpop.permute.xlu0 %664
      %vm682 = vcmask 1043456
      %v683 = vrot.slane %v410, 4
      %v684 = vrot.slane %v411, 4
      %v685 = vsel %vm682, %v683, %v684
      %v686 = vrot.slane %v412, 4
      %v687 = vsel %vm682, %v684, %v686
      %v688 = vrot.slane %v413, 4
      %v689 = vsel %vm682, %v686, %v688
      %v690 = vrot.slane %v414, 4
      %v691 = vsel %vm682, %v688, %v690
      %v692 = vrot.slane %v415, 4
      %v693 = vsel %vm682, %v690, %v692
      %v694 = vrot.slane %v416, 4
      %v695 = vsel %vm682, %v692, %v694
      %v696 = vrot.slane %v417, 4
      %v697 = vsel %vm682, %v694, %v696
      %v698 = vrot.slane %v418, 4
      %v699 = vsel %vm682, %v696, %v698
      %v700 = vrot.slane %v419, 4
      %v701 = vsel %vm682, %v698, %v700
      %v702 = vrot.slane %v420, 4
      %v703 = vsel %vm682, %v700, %v702
      %v704 = vrot.slane %v421, 4
      %v705 = vsel %vm682, %v702, %v704
      %v706 = vrot.slane %v422, 4
      %v707 = vsel %vm682, %v704, %v706
      %v708 = vrot.slane %v423, 4
      %v709 = vsel %vm682, %v706, %v708
      %v710 = vrot.slane %v424, 4
      %v711 = vsel %vm682, %v708, %v710
      %v712 = vrot.slane %v425, 4
      %v713 = vsel %vm682, %v710, %v712
      %714 = vrot.lane.b32.xlu0 %v685, 16
      %v715 = vpop.permute.xlu0 %714
      %716 = vrot.lane.b32.xlu0 %v687, 16
      %v717 = vpop.permute.xlu0 %716
      %718 = vrot.lane.b32.xlu0 %v689, 16
      %v719 = vpop.permute.xlu0 %718
      %720 = vrot.lane.b32.xlu0 %v691, 16
      %v721 = vpop.permute.xlu0 %720
      %722 = vrot.lane.b32.xlu0 %v693, 16
      %v723 = vpop.permute.xlu0 %722
      %724 = vrot.lane.b32.xlu0 %v695, 16
      %v725 = vpop.permute.xlu0 %724
      %726 = vrot.lane.b32.xlu0 %v697, 16
      %v727 = vpop.permute.xlu0 %726
      %728 = vrot.lane.b32.xlu0 %v699, 16
      %v729 = vpop.permute.xlu0 %728
      %730 = vrot.lane.b32.xlu0 %v701, 16
      %v731 = vpop.permute.xlu0 %730
      %732 = vrot.lane.b32.xlu0 %v703, 16
      %v733 = vpop.permute.xlu0 %732
      %734 = vrot.lane.b32.xlu0 %v705, 16
      %v735 = vpop.permute.xlu0 %734
      %736 = vrot.lane.b32.xlu0 %v707, 16
      %v737 = vpop.permute.xlu0 %736
      %738 = vrot.lane.b32.xlu0 %v709, 16
      %v739 = vpop.permute.xlu0 %738
      %740 = vrot.lane.b32.xlu0 %v711, 16
      %v741 = vpop.permute.xlu0 %740
      %742 = vrot.lane.b32.xlu0 %v713, 16
      %v743 = vpop.permute.xlu0 %742
      %744 = vrot.lane.b32.xlu0 %v712, 16
      %v745 = vpop.permute.xlu0 %744
      %vm762 = vcmask 31744
      %v763 = vsel %vm762, %v410, %v475
      %v764 = vsel %vm762, %v411, %v477
      %v765 = vsel %vm762, %v412, %v479
      %v766 = vsel %vm762, %v413, %v481
      %v767 = vsel %vm762, %v414, %v483
      %v768 = vsel %vm762, %v415, %v485
      %v769 = vsel %vm762, %v416, %v487
      %v770 = vsel %vm762, %v417, %v489
      %v771 = vsel %vm762, %v418, %v491
      %v772 = vsel %vm762, %v419, %v493
      %v773 = vsel %vm762, %v420, %v495
      %v774 = vsel %vm762, %v421, %v497
      %v775 = vsel %vm762, %v422, %v499
      %v776 = vsel %vm762, %v423, %v501
      %v777 = vsel %vm762, %v424, %v503
      %v778 = vsel %vm762, %v425, %v505
      %vm779 = vcmask 64512
      %v780 = vsel %vm779, %v763, %v555
      %v781 = vsel %vm779, %v764, %v557
      %v782 = vsel %vm779, %v765, %v559
      %v783 = vsel %vm779, %v766, %v561
      %v784 = vsel %vm779, %v767, %v563
      %v785 = vsel %vm779, %v768, %v565
      %v786 = vsel %vm779, %v769, %v567
      %v787 = vsel %vm779, %v770, %v569
      %v788 = vsel %vm779, %v771, %v571
      %v789 = vsel %vm779, %v772, %v573
      %v790 = vsel %vm779, %v773, %v575
      %v791 = vsel %vm779, %v774, %v577
      %v792 = vsel %vm779, %v775, %v579
      %v793 = vsel %vm779, %v776, %v581
      %v794 = vsel %vm779, %v777, %v583
      %v795 = vsel %vm779, %v778, %v585
      %vm796 = vcmask 97280
      %v797 = vsel %vm796, %v780, %v635
      %v798 = vsel %vm796, %v781, %v637
      %v799 = vsel %vm796, %v782, %v639
      %v800 = vsel %vm796, %v783, %v641
      %v801 = vsel %vm796, %v784, %v643
      %v802 = vsel %vm796, %v785, %v645
      %v803 = vsel %vm796, %v786, %v647
      %v804 = vsel %vm796, %v787, %v649
      %v805 = vsel %vm796, %v788, %v651
      %v806 = vsel %vm796, %v789, %v653
      %v807 = vsel %vm796, %v790, %v655
      %v808 = vsel %vm796, %v791, %v657
      %v809 = vsel %vm796, %v792, %v659
      %v810 = vsel %vm796, %v793, %v661
      %v811 = vsel %vm796, %v794, %v663
      %v812 = vsel %vm796, %v795, %v665
      %vm813 = vcmask 130048
      %v814 = vsel %vm813, %v797, %v715
      %v815 = vsel %vm813, %v798, %v717
      %v816 = vsel %vm813, %v799, %v719
      %v817 = vsel %vm813, %v800, %v721
      %v818 = vsel %vm813, %v801, %v723
      %v819 = vsel %vm813, %v802, %v725
      %v820 = vsel %vm813, %v803, %v727
      %v821 = vsel %vm813, %v804, %v729
      %v822 = vsel %vm813, %v805, %v731
      %v823 = vsel %vm813, %v806, %v733
      %v824 = vsel %vm813, %v807, %v735
      %v825 = vsel %vm813, %v808, %v737
      %v826 = vsel %vm813, %v809, %v739
      %v827 = vsel %vm813, %v810, %v741
      %v828 = vsel %vm813, %v811, %v743
      %v829 = vsel %vm813, %v812, %v745
      %v830 = vld [vmem:[%s1] sm:$0xff]
      %v831 = vld [vmem:[%s1 + $0x8] sm:$0xff]
      %v832 = vld [vmem:[%s1 + $0x10] sm:$0xf]
      %v833 = vld [vmem:[%s2] sm:$0x1]
      %v835 = vperm.slane %v833, 0
      %vm837 = vcmask 162816
      %v839 = vsel %vm837, %v814, 0
      %v842 = vsel %vm837, %v815, 0
      %v845 = vsel %vm837, %v816, 0
      %v848 = vsel %vm837, %v817, 0
      %v851 = vsel %vm837, %v818, 0
      %v854 = vsel %vm837, %v819, 0
      %v857 = vsel %vm837, %v820, 0
      %v860 = vsel %vm837, %v821, 0
      %v863 = vsel %vm837, %v822, 0
      %v866 = vsel %vm837, %v823, 0
      %v869 = vsel %vm837, %v824, 0
      %v872 = vsel %vm837, %v825, 0
      %v875 = vsel %vm837, %v826, 0
      %v878 = vsel %vm837, %v827, 0
      %v881 = vsel %vm837, %v828, 0
      %v884 = vsel %vm837, %v829, 0
      %v887 = vsel %vm682, %v832, 0
      %889 = vmatpush.msra.mxu0 0.0
      %890 = vmatpush.msra.mxu0 0.0
      %891 = vmatpush.msra.mxu0 0.0
      %892 = vmatpush.msra.mxu0 0.0
      %893 = vmatpush.msra.mxu0 0.0
      %894 = vmatpush.msra.mxu0 0.0
      %895 = vmatpush.msra.mxu0 0.0
      %896 = vmatpush.msra.mxu0 0.0
      %897 = vmatpush.msra.mxu0 0.0
      %898 = vmatpush.msra.mxu0 0.0
      %899 = vmatpush.msra.mxu0 0.0
      %900 = vmatpush.msra.mxu0 0.0
      %901 = vmatpush.msra.mxu0 0.0
      %902 = vmatpush.msra.mxu0 %v887
      %903 = vmatpush.msra.mxu0 %v831
      %904 = vmatpush.msra.mxu0 %v830
      %905 = vmatmul.f32.gmra.mxu0 %v839
      %v906 = vpop.f32.mrf.mxu0
      %v907 = vadd.f32 %v835, %v906
      %908 = vmatmul.f32.gmra.mxu0 %v842
      %v909 = vpop.f32.mrf.mxu0
      %v910 = vadd.f32 %v835, %v909
      %911 = vmatmul.f32.gmra.mxu0 %v845
      %v912 = vpop.f32.mrf.mxu0
      %v913 = vadd.f32 %v835, %v912
      %914 = vmatmul.f32.gmra.mxu0 %v848
      %v915 = vpop.f32.mrf.mxu0
      %v916 = vadd.f32 %v835, %v915
      %917 = vmatmul.f32.gmra.mxu0 %v851
      %v918 = vpop.f32.mrf.mxu0
      %v919 = vadd.f32 %v835, %v918
      %920 = vmatmul.f32.gmra.mxu0 %v854
      %v921 = vpop.f32.mrf.mxu0
      %v922 = vadd.f32 %v835, %v921
      %923 = vmatmul.f32.gmra.mxu0 %v857
      %v924 = vpop.f32.mrf.mxu0
      %v925 = vadd.f32 %v835, %v924
      %926 = vmatmul.f32.gmra.mxu0 %v860
      %v927 = vpop.f32.mrf.mxu0
      %v928 = vadd.f32 %v835, %v927
      %929 = vmatmul.f32.gmra.mxu0 %v863
      %v930 = vpop.f32.mrf.mxu0
      %v931 = vadd.f32 %v835, %v930
      %932 = vmatmul.f32.gmra.mxu0 %v866
      %v933 = vpop.f32.mrf.mxu0
      %v934 = vadd.f32 %v835, %v933
      %935 = vmatmul.f32.gmra.mxu0 %v869
      %v936 = vpop.f32.mrf.mxu0
      %v937 = vadd.f32 %v835, %v936
      %938 = vmatmul.f32.gmra.mxu0 %v872
      %v939 = vpop.f32.mrf.mxu0
      %v940 = vadd.f32 %v835, %v939
      %941 = vmatmul.f32.gmra.mxu0 %v875
      %v942 = vpop.f32.mrf.mxu0
      %v943 = vadd.f32 %v835, %v942
      %944 = vmatmul.f32.gmra.mxu0 %v878
      %v945 = vpop.f32.mrf.mxu0
      %v946 = vadd.f32 %v835, %v945
      %947 = vmatmul.f32.gmra.mxu0 %v881
      %v948 = vpop.f32.mrf.mxu0
      %v949 = vadd.f32 %v835, %v948
      %950 = vmatmul.f32.gmra.mxu0 %v884
      %v951 = vpop.f32.mrf.mxu0
      %v952 = vadd.f32 %v835, %v951
      %953 = vdwg.mxu0
      %v954 = vmax.f32 %v907, 0.0
      %v955 = vmax.f32 %v910, 0.0
      %v956 = vmax.f32 %v913, 0.0
      %v957 = vmax.f32 %v916, 0.0
      %v958 = vmax.f32 %v919, 0.0
      %v959 = vmax.f32 %v922, 0.0
      %v960 = vmax.f32 %v925, 0.0
      %v961 = vmax.f32 %v928, 0.0
      %v962 = vmax.f32 %v931, 0.0
      %v963 = vmax.f32 %v934, 0.0
      %v964 = vmax.f32 %v937, 0.0
      %v965 = vmax.f32 %v940, 0.0
      %v966 = vmax.f32 %v943, 0.0
      %v967 = vmax.f32 %v946, 0.0
      %v968 = vmax.f32 %v949, 0.0
      %v969 = vmax.f32 %v952, 0.0
      %vm970 = vcmask 261120
      %971 = vst.msk [vmem:[#allocation2] sm:$0xff] %vm970, %v954
      %972 = vst.msk [vmem:[#allocation2 + $0x8] sm:$0xff] %vm970, %v955
      %973 = vst.msk [vmem:[#allocation2 + $0x10] sm:$0xff] %vm970, %v956
      %974 = vst.msk [vmem:[#allocation2 + $0x18] sm:$0xff] %vm970, %v957
      %975 = vst.msk [vmem:[#allocation2 + $0x20] sm:$0xff] %vm970, %v958
      %976 = vst.msk [vmem:[#allocation2 + $0x28] sm:$0xff] %vm970, %v959
      %977 = vst.msk [vmem:[#allocation2 + $0x30] sm:$0xff] %vm970, %v960
      %978 = vst.msk [vmem:[#allocation2 + $0x38] sm:$0xff] %vm970, %v961
      %979 = vst.msk [vmem:[#allocation2 + $0x40] sm:$0xff] %vm970, %v962
      %980 = vst.msk [vmem:[#allocation2 + $0x48] sm:$0xff] %vm970, %v963
      %981 = vst.msk [vmem:[#allocation2 + $0x50] sm:$0xff] %vm970, %v964
      %982 = vst.msk [vmem:[#allocation2 + $0x58] sm:$0xff] %vm970, %v965
      %983 = vst.msk [vmem:[#allocation2 + $0x60] sm:$0xff] %vm970, %v966
      %984 = vst.msk [vmem:[#allocation2 + $0x68] sm:$0xff] %vm970, %v967
      %985 = vst.msk [vmem:[#allocation2 + $0x70] sm:$0xff] %vm970, %v968
      %vm986 = vcmask 257024
      %987 = vst.msk [vmem:[#allocation2 + $0x78] sm:$0xf] %vm986, %v969
      %v988 = vld [vmem:[#allocation2] sm:$0xff]
      %v989 = vld [vmem:[#allocation2 + $0x8] sm:$0xff]
      %v990 = vld [vmem:[#allocation2 + $0x10] sm:$0xff]
      %v991 = vld [vmem:[#allocation2 + $0x18] sm:$0xff]
      %v992 = vld [vmem:[#allocation2 + $0x20] sm:$0xff]
      %v993 = vld [vmem:[#allocation2 + $0x28] sm:$0xff]
      %v994 = vld [vmem:[#allocation2 + $0x30] sm:$0xff]
      %v995 = vld [vmem:[#allocation2 + $0x38] sm:$0xff]
      %v996 = vld [vmem:[#allocation2 + $0x40] sm:$0xff]
      %v997 = vld [vmem:[#allocation2 + $0x48] sm:$0xff]
      %v998 = vld [vmem:[#allocation2 + $0x50] sm:$0xff]
      %v999 = vld [vmem:[#allocation2 + $0x58] sm:$0xff]
      %v1000 = vld [vmem:[#allocation2 + $0x60] sm:$0xff]
      %v1001 = vld [vmem:[#allocation2 + $0x68] sm:$0xff]
      %v1002 = vld [vmem:[#allocation2 + $0x70] sm:$0xff]
      %v1003 = vld [vmem:[#allocation2 + $0x2] sm:$0xff]
      %v1004 = vld [vmem:[#allocation2 + $0xa] sm:$0xff]
      %v1005 = vld [vmem:[#allocation2 + $0x12] sm:$0xff]
      %v1006 = vld [vmem:[#allocation2 + $0x1a] sm:$0xff]
      %v1007 = vld [vmem:[#allocation2 + $0x22] sm:$0xff]
      %v1008 = vld [vmem:[#allocation2 + $0x2a] sm:$0xff]
      %v1009 = vld [vmem:[#allocation2 + $0x32] sm:$0xff]
      %v1010 = vld [vmem:[#allocation2 + $0x3a] sm:$0xff]
      %v1011 = vld [vmem:[#allocation2 + $0x42] sm:$0xff]
      %v1012 = vld [vmem:[#allocation2 + $0x4a] sm:$0xff]
      %v1013 = vld [vmem:[#allocation2 + $0x52] sm:$0xff]
      %v1014 = vld [vmem:[#allocation2 + $0x5a] sm:$0xff]
      %v1015 = vld [vmem:[#allocation2 + $0x62] sm:$0xff]
      %v1016 = vld [vmem:[#allocation2 + $0x6a] sm:$0xff]
      %v1017 = vld [vmem:[#allocation2 + $0x72] sm:$0xff]
      %v1018 = vld [vmem:[#allocation2 + $0x4] sm:$0xff]
      %v1019 = vld [vmem:[#allocation2 + $0xc] sm:$0xff]
      %v1020 = vld [vmem:[#allocation2 + $0x14] sm:$0xff]
      %v1021 = vld [vmem:[#allocation2 + $0x1c] sm:$0xff]
      %v1022 = vld [vmem:[#allocation2 + $0x24] sm:$0xff]
      %v1023 = vld [vmem:[#allocation2 + $0x2c] sm:$0xff]
      %v1024 = vld [vmem:[#allocation2 + $0x34] sm:$0xff]
      %v1025 = vld [vmem:[#allocation2 + $0x3c] sm:$0xff]
      %v1026 = vld [vmem:[#allocation2 + $0x44] sm:$0xff]
      %v1027 = vld [vmem:[#allocation2 + $0x4c] sm:$0xff]
      %v1028 = vld [vmem:[#allocation2 + $0x54] sm:$0xff]
      %v1029 = vld [vmem:[#allocation2 + $0x5c] sm:$0xff]
      %v1030 = vld [vmem:[#allocation2 + $0x64] sm:$0xff]
      %v1031 = vld [vmem:[#allocation2 + $0x6c] sm:$0xff]
      %v1032 = vld [vmem:[#allocation2 + $0x74] sm:$0xff]
      %1048 = vrot.lane.b32.xlu0 %v1003, 32
      %v1049 = vpop.permute.xlu0 %1048
      %1050 = vrot.lane.b32.xlu0 %v1004, 32
      %v1051 = vpop.permute.xlu0 %1050
      %1052 = vrot.lane.b32.xlu0 %v1005, 32
      %v1053 = vpop.permute.xlu0 %1052
      %1054 = vrot.lane.b32.xlu0 %v1006, 32
      %v1055 = vpop.permute.xlu0 %1054
      %1056 = vrot.lane.b32.xlu0 %v1007, 32
      %v1057 = vpop.permute.xlu0 %1056
      %1058 = vrot.lane.b32.xlu0 %v1008, 32
      %v1059 = vpop.permute.xlu0 %1058
      %1060 = vrot.lane.b32.xlu0 %v1009, 32
      %v1061 = vpop.permute.xlu0 %1060
      %1062 = vrot.lane.b32.xlu0 %v1010, 32
      %v1063 = vpop.permute.xlu0 %1062
      %1064 = vrot.lane.b32.xlu0 %v1011, 32
      %v1065 = vpop.permute.xlu0 %1064
      %1066 = vrot.lane.b32.xlu0 %v1012, 32
      %v1067 = vpop.permute.xlu0 %1066
      %1068 = vrot.lane.b32.xlu0 %v1013, 32
      %v1069 = vpop.permute.xlu0 %1068
      %1070 = vrot.lane.b32.xlu0 %v1014, 32
      %v1071 = vpop.permute.xlu0 %1070
      %1072 = vrot.lane.b32.xlu0 %v1015, 32
      %v1073 = vpop.permute.xlu0 %1072
      %1074 = vrot.lane.b32.xlu0 %v1016, 32
      %v1075 = vpop.permute.xlu0 %1074
      %1076 = vrot.lane.b32.xlu0 %v1017, 32
      %v1077 = vpop.permute.xlu0 %1076
      %1108 = vrot.lane.b32.xlu0 %v1018, 64
      %v1109 = vpop.permute.xlu0 %1108
      %1110 = vrot.lane.b32.xlu0 %v1019, 64
      %v1111 = vpop.permute.xlu0 %1110
      %1112 = vrot.lane.b32.xlu0 %v1020, 64
      %v1113 = vpop.permute.xlu0 %1112
      %1114 = vrot.lane.b32.xlu0 %v1021, 64
      %v1115 = vpop.permute.xlu0 %1114
      %1116 = vrot.lane.b32.xlu0 %v1022, 64
      %v1117 = vpop.permute.xlu0 %1116
      %1118 = vrot.lane.b32.xlu0 %v1023, 64
      %v1119 = vpop.permute.xlu0 %1118
      %1120 = vrot.lane.b32.xlu0 %v1024, 64
      %v1121 = vpop.permute.xlu0 %1120
      %1122 = vrot.lane.b32.xlu0 %v1025, 64
      %v1123 = vpop.permute.xlu0 %1122
      %1124 = vrot.lane.b32.xlu0 %v1026, 64
      %v1125 = vpop.permute.xlu0 %1124
      %1126 = vrot.lane.b32.xlu0 %v1027, 64
      %v1127 = vpop.permute.xlu0 %1126
      %1128 = vrot.lane.b32.xlu0 %v1028, 64
      %v1129 = vpop.permute.xlu0 %1128
      %1130 = vrot.lane.b32.xlu0 %v1029, 64
      %v1131 = vpop.permute.xlu0 %1130
      %1132 = vrot.lane.b32.xlu0 %v1030, 64
      %v1133 = vpop.permute.xlu0 %1132
      %1134 = vrot.lane.b32.xlu0 %v1031, 64
      %v1135 = vpop.permute.xlu0 %1134
      %1136 = vrot.lane.b32.xlu0 %v1032, 64
      %v1137 = vpop.permute.xlu0 %1136
      %v1153 = vsel %vm970, %v988, %v1049
      %v1154 = vsel %vm970, %v989, %v1051
      %v1155 = vsel %vm970, %v990, %v1053
      %v1156 = vsel %vm970, %v991, %v1055
      %v1157 = vsel %vm970, %v992, %v1057
      %v1158 = vsel %vm970, %v993, %v1059
      %v1159 = vsel %vm970, %v994, %v1061
      %v1160 = vsel %vm970, %v995, %v1063
      %v1161 = vsel %vm970, %v996, %v1065
      %v1162 = vsel %vm970, %v997, %v1067
      %v1163 = vsel %vm970, %v998, %v1069
      %v1164 = vsel %vm970, %v999, %v1071
      %v1165 = vsel %vm970, %v1000, %v1073
      %v1166 = vsel %vm970, %v1001, %v1075
      %v1167 = vsel %vm970, %v1002, %v1077
      %vm1168 = vcmask 523264
      %v1169 = vsel %vm1168, %v1153, %v1109
      %v1170 = vsel %vm1168, %v1154, %v1111
      %v1171 = vsel %vm1168, %v1155, %v1113
      %v1172 = vsel %vm1168, %v1156, %v1115
      %v1173 = vsel %vm1168, %v1157, %v1117
      %v1174 = vsel %vm1168, %v1158, %v1119
      %v1175 = vsel %vm1168, %v1159, %v1121
      %v1176 = vsel %vm1168, %v1160, %v1123
      %v1177 = vsel %vm1168, %v1161, %v1125
      %v1178 = vsel %vm1168, %v1162, %v1127
      %v1179 = vsel %vm1168, %v1163, %v1129
      %v1180 = vsel %vm1168, %v1164, %v1131
      %v1181 = vsel %vm1168, %v1165, %v1133
      %v1182 = vsel %vm1168, %v1166, %v1135
      %v1183 = vsel %vm1168, %v1167, %v1137
      %v1184 = vld [vmem:[%s3] sm:$0xff]
      %v1185 = vld [vmem:[%s3 + $0x8] sm:$0xff]
      %v1186 = vld [vmem:[%s3 + $0x10] sm:$0xff]
      %v1187 = vld [vmem:[%s3 + $0x18] sm:$0xff]
      %v1188 = vld [vmem:[%s3 + $0x20] sm:$0xff]
      %v1189 = vld [vmem:[%s3 + $0x28] sm:$0xff]
      %v1190 = vld [vmem:[%s3 + $0x30] sm:$0xff]
      %v1191 = vld [vmem:[%s3 + $0x38] sm:$0xff]
      %v1192 = vld [vmem:[%s3 + $0x40] sm:$0xff]
      %v1193 = vld [vmem:[%s3 + $0x48] sm:$0xff]
      %v1194 = vld [vmem:[%s3 + $0x50] sm:$0xff]
      %v1195 = vld [vmem:[%s3 + $0x58] sm:$0xff]
      %v1196 = vld [vmem:[%s4] sm:$0x1]
      %v1197 = vperm.slane %v1196, 0
      %vm1198 = vcmask 785408
      %v1200 = vsel %vm1198, %v1169, 0
      %v1203 = vsel %vm1198, %v1170, 0
      %v1206 = vsel %vm1198, %v1171, 0
      %v1209 = vsel %vm1198, %v1172, 0
      %v1212 = vsel %vm1198, %v1173, 0
      %v1215 = vsel %vm1198, %v1174, 0
      %v1218 = vsel %vm1198, %v1175, 0
      %v1221 = vsel %vm1198, %v1176, 0
      %v1224 = vsel %vm1198, %v1177, 0
      %v1227 = vsel %vm1198, %v1178, 0
      %v1230 = vsel %vm1198, %v1179, 0
      %v1233 = vsel %vm1198, %v1180, 0
      %v1236 = vsel %vm1198, %v1181, 0
      %v1239 = vsel %vm1198, %v1182, 0
      %v1242 = vsel %vm1198, %v1183, 0
      %1244 = vmatpush.msra.mxu0 0.0
      %1245 = vmatpush.msra.mxu0 0.0
      %1246 = vmatpush.msra.mxu0 0.0
      %1247 = vmatpush.msra.mxu0 0.0
      %1248 = vmatpush.msra.mxu0 %v1195
      %1249 = vmatpush.msra.mxu0 %v1194
      %1250 = vmatpush.msra.mxu0 %v1193
      %1251 = vmatpush.msra.mxu0 %v1192
      %1252 = vmatpush.msra.mxu0 %v1191
      %1253 = vmatpush.msra.mxu0 %v1190
      %1254 = vmatpush.msra.mxu0 %v1189
      %1255 = vmatpush.msra.mxu0 %v1188
      %1256 = vmatpush.msra.mxu0 %v1187
      %1257 = vmatpush.msra.mxu0 %v1186
      %1258 = vmatpush.msra.mxu0 %v1185
      %1259 = vmatpush.msra.mxu0 %v1184
      %1260 = vmatmul.f32.gmra.mxu0 %v1200
      %v1261 = vpop.f32.mrf.mxu0
      %v1262 = vadd.f32 %v1197, %v1261
      %1263 = vmatmul.f32.gmra.mxu0 %v1203
      %v1264 = vpop.f32.mrf.mxu0
      %v1265 = vadd.f32 %v1197, %v1264
      %1266 = vmatmul.f32.gmra.mxu0 %v1206
      %v1267 = vpop.f32.mrf.mxu0
      %v1268 = vadd.f32 %v1197, %v1267
      %1269 = vmatmul.f32.gmra.mxu0 %v1209
      %v1270 = vpop.f32.mrf.mxu0
      %v1271 = vadd.f32 %v1197, %v1270
      %1272 = vmatmul.f32.gmra.mxu0 %v1212
      %v1273 = vpop.f32.mrf.mxu0
      %v1274 = vadd.f32 %v1197, %v1273
      %1275 = vmatmul.f32.gmra.mxu0 %v1215
      %v1276 = vpop.f32.mrf.mxu0
      %v1277 = vadd.f32 %v1197, %v1276
      %1278 = vmatmul.f32.gmra.mxu0 %v1218
      %v1279 = vpop.f32.mrf.mxu0
      %v1280 = vadd.f32 %v1197, %v1279
      %1281 = vmatmul.f32.gmra.mxu0 %v1221
      %v1282 = vpop.f32.mrf.mxu0
      %v1283 = vadd.f32 %v1197, %v1282
      %1284 = vmatmul.f32.gmra.mxu0 %v1224
      %v1285 = vpop.f32.mrf.mxu0
      %v1286 = vadd.f32 %v1197, %v1285
      %1287 = vmatmul.f32.gmra.mxu0 %v1227
      %v1288 = vpop.f32.mrf.mxu0
      %v1289 = vadd.f32 %v1197, %v1288
      %1290 = vmatmul.f32.gmra.mxu0 %v1230
      %v1291 = vpop.f32.mrf.mxu0
      %v1292 = vadd.f32 %v1197, %v1291
      %1293 = vmatmul.f32.gmra.mxu0 %v1233
      %v1294 = vpop.f32.mrf.mxu0
      %v1295 = vadd.f32 %v1197, %v1294
      %1296 = vmatmul.f32.gmra.mxu0 %v1236
      %v1297 = vpop.f32.mrf.mxu0
      %v1298 = vadd.f32 %v1197, %v1297
      %1299 = vmatmul.f32.gmra.mxu0 %v1239
      %v1300 = vpop.f32.mrf.mxu0
      %v1301 = vadd.f32 %v1197, %v1300
      %1302 = vmatmul.f32.gmra.mxu0 %v1242
      %v1303 = vpop.f32.mrf.mxu0
      %v1304 = vadd.f32 %v1197, %v1303
      %1305 = vdwg.mxu0
      %v1306 = vmax.f32 %v1262, 0.0
      %v1307 = vmax.f32 %v1265, 0.0
      %v1308 = vmax.f32 %v1268, 0.0
      %v1309 = vmax.f32 %v1271, 0.0
      %v1310 = vmax.f32 %v1274, 0.0
      %v1311 = vmax.f32 %v1277, 0.0
      %v1312 = vmax.f32 %v1280, 0.0
      %v1313 = vmax.f32 %v1283, 0.0
      %v1314 = vmax.f32 %v1286, 0.0
      %v1315 = vmax.f32 %v1289, 0.0
      %v1316 = vmax.f32 %v1292, 0.0
      %v1317 = vmax.f32 %v1295, 0.0
      %v1318 = vmax.f32 %v1298, 0.0
      %v1319 = vmax.f32 %v1301, 0.0
      %v1320 = vmax.f32 %v1304, 0.0
      %v1321 = vadd.f32 %v1306, %v1003
      %v1322 = vadd.f32 %v1307, %v1004
      %v1323 = vadd.f32 %v1308, %v1005
      %v1324 = vadd.f32 %v1309, %v1006
      %v1325 = vadd.f32 %v1310, %v1007
      %v1326 = vadd.f32 %v1311, %v1008
      %v1327 = vadd.f32 %v1312, %v1009
      %v1328 = vadd.f32 %v1313, %v1010
      %v1329 = vadd.f32 %v1314, %v1011
      %v1330 = vadd.f32 %v1315, %v1012
      %v1331 = vadd.f32 %v1316, %v1013
      %v1332 = vadd.f32 %v1317, %v1014
      %v1333 = vadd.f32 %v1318, %v1015
      %v1334 = vadd.f32 %v1319, %v1016
      %v1335 = vadd.f32 %v1320, %v1017
      %1336 = vst.msk [vmem:[#allocation2] sm:$0xff] %vm970, %v1321
      %1337 = vst.msk [vmem:[#allocation2 + $0x8] sm:$0xff] %vm970, %v1322
      %1338 = vst.msk [vmem:[#allocation2 + $0x10] sm:$0xff] %vm970, %v1323
      %1339 = vst.msk [vmem:[#allocation2 + $0x18] sm:$0xff] %vm970, %v1324
      %1340 = vst.msk [vmem:[#allocation2 + $0x20] sm:$0xff] %vm970, %v1325
      %1341 = vst.msk [vmem:[#allocation2 + $0x28] sm:$0xff] %vm970, %v1326
      %1342 = vst.msk [vmem:[#allocation2 + $0x30] sm:$0xff] %vm970, %v1327
      %1343 = vst.msk [vmem:[#allocation2 + $0x38] sm:$0xff] %vm970, %v1328
      %1344 = vst.msk [vmem:[#allocation2 + $0x40] sm:$0xff] %vm970, %v1329
      %1345 = vst.msk [vmem:[#allocation2 + $0x48] sm:$0xff] %vm970, %v1330
      %1346 = vst.msk [vmem:[#allocation2 + $0x50] sm:$0xff] %vm970, %v1331
      %1347 = vst.msk [vmem:[#allocation2 + $0x58] sm:$0xff] %vm970, %v1332
      %1348 = vst.msk [vmem:[#allocation2 + $0x60] sm:$0xff] %vm970, %v1333
      %1349 = vst.msk [vmem:[#allocation2 + $0x68] sm:$0xff] %vm970, %v1334
      %1350 = vst.msk [vmem:[#allocation2 + $0x70] sm:$0xff] %vm970, %v1335
      %v1351 = vld [vmem:[#allocation2] sm:$0xff]
      %v1352 = vld [vmem:[#allocation2 + $0x8] sm:$0xff]
      %v1353 = vld [vmem:[#allocation2 + $0x10] sm:$0xff]
      %v1354 = vld [vmem:[#allocation2 + $0x18] sm:$0xff]
      %v1355 = vld [vmem:[#allocation2 + $0x20] sm:$0xff]
      %v1356 = vld [vmem:[#allocation2 + $0x28] sm:$0xff]
      %v1357 = vld [vmem:[#allocation2 + $0x30] sm:$0xff]
      %v1358 = vld [vmem:[#allocation2 + $0x38] sm:$0xff]
      %v1359 = vld [vmem:[#allocation2 + $0x40] sm:$0xff]
      %v1360 = vld [vmem:[#allocation2 + $0x48] sm:$0xff]
      %v1361 = vld [vmem:[#allocation2 + $0x50] sm:$0xff]
      %v1362 = vld [vmem:[#allocation2 + $0x58] sm:$0xff]
      %v1363 = vld [vmem:[#allocation2 + $0x60] sm:$0xff]
      %v1364 = vld [vmem:[#allocation2 + $0x68] sm:$0xff]
      %v1365 = vld [vmem:[#allocation2 + $0x4] sm:$0xff]
      %v1366 = vld [vmem:[#allocation2 + $0xc] sm:$0xff]
      %v1367 = vld [vmem:[#allocation2 + $0x14] sm:$0xff]
      %v1368 = vld [vmem:[#allocation2 + $0x1c] sm:$0xff]
      %v1369 = vld [vmem:[#allocation2 + $0x24] sm:$0xff]
      %v1370 = vld [vmem:[#allocation2 + $0x2c] sm:$0xff]
      %v1371 = vld [vmem:[#allocation2 + $0x34] sm:$0xff]
      %v1372 = vld [vmem:[#allocation2 + $0x3c] sm:$0xff]
      %v1373 = vld [vmem:[#allocation2 + $0x44] sm:$0xff]
      %v1374 = vld [vmem:[#allocation2 + $0x4c] sm:$0xff]
      %v1375 = vld [vmem:[#allocation2 + $0x54] sm:$0xff]
      %v1376 = vld [vmem:[#allocation2 + $0x5c] sm:$0xff]
      %v1377 = vld [vmem:[#allocation2 + $0x64] sm:$0xff]
      %v1378 = vld [vmem:[#allocation2 + $0x6c] sm:$0xff]
      %v1379 = vld [vmem:[#allocation2 + $0x70] sm:$0xff]
      %1394 = vrot.lane.b32.xlu0 %v1365, 32
      %v1395 = vpop.permute.xlu0 %1394
      %1396 = vrot.lane.b32.xlu0 %v1366, 32
      %v1397 = vpop.permute.xlu0 %1396
      %1398 = vrot.lane.b32.xlu0 %v1367, 32
      %v1399 = vpop.permute.xlu0 %1398
      %1400 = vrot.lane.b32.xlu0 %v1368, 32
      %v1401 = vpop.permute.xlu0 %1400
      %1402 = vrot.lane.b32.xlu0 %v1369, 32
      %v1403 = vpop.permute.xlu0 %1402
      %1404 = vrot.lane.b32.xlu0 %v1370, 32
      %v1405 = vpop.permute.xlu0 %1404
      %1406 = vrot.lane.b32.xlu0 %v1371, 32
      %v1407 = vpop.permute.xlu0 %1406
      %1408 = vrot.lane.b32.xlu0 %v1372, 32
      %v1409 = vpop.permute.xlu0 %1408
      %1410 = vrot.lane.b32.xlu0 %v1373, 32
      %v1411 = vpop.permute.xlu0 %1410
      %1412 = vrot.lane.b32.xlu0 %v1374, 32
      %v1413 = vpop.permute.xlu0 %1412
      %1414 = vrot.lane.b32.xlu0 %v1375, 32
      %v1415 = vpop.permute.xlu0 %1414
      %1416 = vrot.lane.b32.xlu0 %v1376, 32
      %v1417 = vpop.permute.xlu0 %1416
      %1418 = vrot.lane.b32.xlu0 %v1377, 32
      %v1419 = vpop.permute.xlu0 %1418
      %1420 = vrot.lane.b32.xlu0 %v1378, 32
      %v1421 = vpop.permute.xlu0 %1420
      %1450 = vrot.lane.b32.xlu0 %v1352, 64
      %v1451 = vpop.permute.xlu0 %1450
      %1452 = vrot.lane.b32.xlu0 %v1353, 64
      %v1453 = vpop.permute.xlu0 %1452
      %1454 = vrot.lane.b32.xlu0 %v1354, 64
      %v1455 = vpop.permute.xlu0 %1454
      %1456 = vrot.lane.b32.xlu0 %v1355, 64
      %v1457 = vpop.permute.xlu0 %1456
      %1458 = vrot.lane.b32.xlu0 %v1356, 64
      %v1459 = vpop.permute.xlu0 %1458
      %1460 = vrot.lane.b32.xlu0 %v1357, 64
      %v1461 = vpop.permute.xlu0 %1460
      %1462 = vrot.lane.b32.xlu0 %v1358, 64
      %v1463 = vpop.permute.xlu0 %1462
      %1464 = vrot.lane.b32.xlu0 %v1359, 64
      %v1465 = vpop.permute.xlu0 %1464
      %1466 = vrot.lane.b32.xlu0 %v1360, 64
      %v1467 = vpop.permute.xlu0 %1466
      %1468 = vrot.lane.b32.xlu0 %v1361, 64
      %v1469 = vpop.permute.xlu0 %1468
      %1470 = vrot.lane.b32.xlu0 %v1362, 64
      %v1471 = vpop.permute.xlu0 %1470
      %1472 = vrot.lane.b32.xlu0 %v1363, 64
      %v1473 = vpop.permute.xlu0 %1472
      %1474 = vrot.lane.b32.xlu0 %v1364, 64
      %v1475 = vpop.permute.xlu0 %1474
      %1476 = vrot.lane.b32.xlu0 %v1379, 64
      %v1477 = vpop.permute.xlu0 %1476
      %v1492 = vsel %vm970, %v1351, %v1395
      %v1493 = vsel %vm970, %v1352, %v1397
      %v1494 = vsel %vm970, %v1353, %v1399
      %v1495 = vsel %vm970, %v1354, %v1401
      %v1496 = vsel %vm970, %v1355, %v1403
      %v1497 = vsel %vm970, %v1356, %v1405
      %v1498 = vsel %vm970, %v1357, %v1407
      %v1499 = vsel %vm970, %v1358, %v1409
      %v1500 = vsel %vm970, %v1359, %v1411
      %v1501 = vsel %vm970, %v1360, %v1413
      %v1502 = vsel %vm970, %v1361, %v1415
      %v1503 = vsel %vm970, %v1362, %v1417
      %v1504 = vsel %vm970, %v1363, %v1419
      %v1505 = vsel %vm970, %v1364, %v1421
      %v1506 = vsel %vm1168, %v1492, %v1451
      %v1507 = vsel %vm1168, %v1493, %v1453
      %v1508 = vsel %vm1168, %v1494, %v1455
      %v1509 = vsel %vm1168, %v1495, %v1457
      %v1510 = vsel %vm1168, %v1496, %v1459
      %v1511 = vsel %vm1168, %v1497, %v1461
      %v1512 = vsel %vm1168, %v1498, %v1463
      %v1513 = vsel %vm1168, %v1499, %v1465
      %v1514 = vsel %vm1168, %v1500, %v1467
      %v1515 = vsel %vm1168, %v1501, %v1469
      %v1516 = vsel %vm1168, %v1502, %v1471
      %v1517 = vsel %vm1168, %v1503, %v1473
      %v1518 = vsel %vm1168, %v1504, %v1475
      %v1519 = vsel %vm1168, %v1505, %v1477
      %s1520 = scalar_lea.vmem %s3, 96
      %v1521 = vld [vmem:[%s1520] sm:$0xff]
      %v1522 = vld [vmem:[%s1520 + $0x8] sm:$0xff]
      %v1523 = vld [vmem:[%s1520 + $0x10] sm:$0xff]
      %v1524 = vld [vmem:[%s1520 + $0x18] sm:$0xff]
      %v1525 = vld [vmem:[%s1520 + $0x20] sm:$0xff]
      %v1526 = vld [vmem:[%s1520 + $0x28] sm:$0xff]
      %v1527 = vld [vmem:[%s1520 + $0x30] sm:$0xff]
      %v1528 = vld [vmem:[%s1520 + $0x38] sm:$0xff]
      %v1529 = vld [vmem:[%s1520 + $0x40] sm:$0xff]
      %v1530 = vld [vmem:[%s1520 + $0x48] sm:$0xff]
      %v1531 = vld [vmem:[%s1520 + $0x50] sm:$0xff]
      %v1532 = vld [vmem:[%s1520 + $0x58] sm:$0xff]
      %v1533 = vld [vmem:[%s4 + $0x1] sm:$0x1]
      %v1534 = vperm.slane %v1533, 0
      %v1536 = vsel %vm1198, %v1506, 0
      %v1539 = vsel %vm1198, %v1507, 0
      %v1542 = vsel %vm1198, %v1508, 0
      %v1545 = vsel %vm1198, %v1509, 0
      %v1548 = vsel %vm1198, %v1510, 0
      %v1551 = vsel %vm1198, %v1511, 0
      %v1554 = vsel %vm1198, %v1512, 0
      %v1557 = vsel %vm1198, %v1513, 0
      %v1560 = vsel %vm1198, %v1514, 0
      %v1563 = vsel %vm1198, %v1515, 0
      %v1566 = vsel %vm1198, %v1516, 0
      %v1569 = vsel %vm1198, %v1517, 0
      %v1572 = vsel %vm1198, %v1518, 0
      %v1575 = vsel %vm1198, %v1519, 0
      %1577 = vmatpush.msra.mxu0 0.0
      %1578 = vmatpush.msra.mxu0 0.0
      %1579 = vmatpush.msra.mxu0 0.0
      %1580 = vmatpush.msra.mxu0 0.0
      %1581 = vmatpush.msra.mxu0 %v1532
      %1582 = vmatpush.msra.mxu0 %v1531
      %1583 = vmatpush.msra.mxu0 %v1530
      %1584 = vmatpush.msra.mxu0 %v1529
      %1585 = vmatpush.msra.mxu0 %v1528
      %1586 = vmatpush.msra.mxu0 %v1527
      %1587 = vmatpush.msra.mxu0 %v1526
      %1588 = vmatpush.msra.mxu0 %v1525
      %1589 = vmatpush.msra.mxu0 %v1524
      %1590 = vmatpush.msra.mxu0 %v1523
      %1591 = vmatpush.msra.mxu0 %v1522
      %1592 = vmatpush.msra.mxu0 %v1521
      %1593 = vmatmul.f32.gmra.mxu0 %v1536
      %v1594 = vpop.f32.mrf.mxu0
      %v1595 = vadd.f32 %v1534, %v1594
      %1596 = vmatmul.f32.gmra.mxu0 %v1539
      %v1597 = vpop.f32.mrf.mxu0
      %v1598 = vadd.f32 %v1534, %v1597
      %1599 = vmatmul.f32.gmra.mxu0 %v1542
      %v1600 = vpop.f32.mrf.mxu0
      %v1601 = vadd.f32 %v1534, %v1600
      %1602 = vmatmul.f32.gmra.mxu0 %v1545
      %v1603 = vpop.f32.mrf.mxu0
      %v1604 = vadd.f32 %v1534, %v1603
      %1605 = vmatmul.f32.gmra.mxu0 %v1548
      %v1606 = vpop.f32.mrf.mxu0
      %v1607 = vadd.f32 %v1534, %v1606
      %1608 = vmatmul.f32.gmra.mxu0 %v1551
      %v1609 = vpop.f32.mrf.mxu0
      %v1610 = vadd.f32 %v1534, %v1609
      %1611 = vmatmul.f32.gmra.mxu0 %v1554
      %v1612 = vpop.f32.mrf.mxu0
      %v1613 = vadd.f32 %v1534, %v1612
      %1614 = vmatmul.f32.gmra.mxu0 %v1557
      %v1615 = vpop.f32.mrf.mxu0
      %v1616 = vadd.f32 %v1534, %v1615
      %1617 = vmatmul.f32.gmra.mxu0 %v1560
      %v1618 = vpop.f32.mrf.mxu0
      %v1619 = vadd.f32 %v1534, %v1618
      %1620 = vmatmul.f32.gmra.mxu0 %v1563
      %v1621 = vpop.f32.mrf.mxu0
      %v1622 = vadd.f32 %v1534, %v1621
      %1623 = vmatmul.f32.gmra.mxu0 %v1566
      %v1624 = vpop.f32.mrf.mxu0
      %v1625 = vadd.f32 %v1534, %v1624
      %1626 = vmatmul.f32.gmra.mxu0 %v1569
      %v1627 = vpop.f32.mrf.mxu0
      %v1628 = vadd.f32 %v1534, %v1627
      %1629 = vmatmul.f32.gmra.mxu0 %v1572
      %v1630 = vpop.f32.mrf.mxu0
      %v1631 = vadd.f32 %v1534, %v1630
      %1632 = vmatmul.f32.gmra.mxu0 %v1575
      %v1633 = vpop.f32.mrf.mxu0
      %v1634 = vadd.f32 %v1534, %v1633
      %1635 = vdwg.mxu0
      %v1636 = vmax.f32 %v1595, 0.0
      %v1637 = vmax.f32 %v1598, 0.0
      %v1638 = vmax.f32 %v1601, 0.0
      %v1639 = vmax.f32 %v1604, 0.0
      %v1640 = vmax.f32 %v1607, 0.0
      %v1641 = vmax.f32 %v1610, 0.0
      %v1642 = vmax.f32 %v1613, 0.0
      %v1643 = vmax.f32 %v1616, 0.0
      %v1644 = vmax.f32 %v1619, 0.0
      %v1645 = vmax.f32 %v1622, 0.0
      %v1646 = vmax.f32 %v1625, 0.0
      %v1647 = vmax.f32 %v1628, 0.0
      %v1648 = vmax.f32 %v1631, 0.0
      %v1649 = vmax.f32 %v1634, 0.0
      %v1650 = vadd.f32 %v1636, %v1365
      %v1651 = vadd.f32 %v1637, %v1366
      %v1652 = vadd.f32 %v1638, %v1367
      %v1653 = vadd.f32 %v1639, %v1368
      %v1654 = vadd.f32 %v1640, %v1369
      %v1655 = vadd.f32 %v1641, %v1370
      %v1656 = vadd.f32 %v1642, %v1371
      %v1657 = vadd.f32 %v1643, %v1372
      %v1658 = vadd.f32 %v1644, %v1373
      %v1659 = vadd.f32 %v1645, %v1374
      %v1660 = vadd.f32 %v1646, %v1375
      %v1661 = vadd.f32 %v1647, %v1376
      %v1662 = vadd.f32 %v1648, %v1377
      %v1663 = vadd.f32 %v1649, %v1378
      %1664 = vst.msk [vmem:[#allocation2] sm:$0xff] %vm970, %v1650
      %1665 = vst.msk [vmem:[#allocation2 + $0x8] sm:$0xff] %vm970, %v1651
      %1666 = vst.msk [vmem:[#allocation2 + $0x10] sm:$0xff] %vm970, %v1652
      %1667 = vst.msk [vmem:[#allocation2 + $0x18] sm:$0xff] %vm970, %v1653
      %1668 = vst.msk [vmem:[#allocation2 + $0x20] sm:$0xff] %vm970, %v1654
      %1669 = vst.msk [vmem:[#allocation2 + $0x28] sm:$0xff] %vm970, %v1655
      %1670 = vst.msk [vmem:[#allocation2 + $0x30] sm:$0xff] %vm970, %v1656
      %1671 = vst.msk [vmem:[#allocation2 + $0x38] sm:$0xff] %vm970, %v1657
      %1672 = vst.msk [vmem:[#allocation2 + $0x40] sm:$0xff] %vm970, %v1658
      %1673 = vst.msk [vmem:[#allocation2 + $0x48] sm:$0xff] %vm970, %v1659
      %1674 = vst.msk [vmem:[#allocation2 + $0x50] sm:$0xff] %vm970, %v1660
      %1675 = vst.msk [vmem:[#allocation2 + $0x58] sm:$0xff] %vm970, %v1661
      %1676 = vst.msk [vmem:[#allocation2 + $0x60] sm:$0xff] %vm970, %v1662
      %1677 = vst.msk [vmem:[#allocation2 + $0x68] sm:$0xff] %vm970, %v1663
      %v1678 = vld [vmem:[#allocation2] sm:$0xff]
      %v1679 = vld [vmem:[#allocation2 + $0x8] sm:$0xff]
      %v1680 = vld [vmem:[#allocation2 + $0x10] sm:$0xff]
      %v1681 = vld [vmem:[#allocation2 + $0x18] sm:$0xff]
      %v1682 = vld [vmem:[#allocation2 + $0x20] sm:$0xff]
      %v1683 = vld [vmem:[#allocation2 + $0x28] sm:$0xff]
      %v1684 = vld [vmem:[#allocation2 + $0x30] sm:$0xff]
      %v1685 = vld [vmem:[#allocation2 + $0x38] sm:$0xff]
      %v1686 = vld [vmem:[#allocation2 + $0x40] sm:$0xff]
      %v1687 = vld [vmem:[#allocation2 + $0x48] sm:$0xff]
      %v1688 = vld [vmem:[#allocation2 + $0x50] sm:$0xff]
      %v1689 = vld [vmem:[#allocation2 + $0x58] sm:$0xff]
      %v1690 = vld [vmem:[#allocation2 + $0x60] sm:$0xff]
      %v1691 = vld [vmem:[#allocation2 + $0x68] sm:$0xff]
      %1704 = vrot.lane.b32.xlu0 %v1679, 32
      %v1705 = vpop.permute.xlu0 %1704
      %1706 = vrot.lane.b32.xlu0 %v1680, 32
      %v1707 = vpop.permute.xlu0 %1706
      %1708 = vrot.lane.b32.xlu0 %v1681, 32
      %v1709 = vpop.permute.xlu0 %1708
      %1710 = vrot.lane.b32.xlu0 %v1682, 32
      %v1711 = vpop.permute.xlu0 %1710
      %1712 = vrot.lane.b32.xlu0 %v1683, 32
      %v1713 = vpop.permute.xlu0 %1712
      %1714 = vrot.lane.b32.xlu0 %v1684, 32
      %v1715 = vpop.permute.xlu0 %1714
      %1716 = vrot.lane.b32.xlu0 %v1685, 32
      %v1717 = vpop.permute.xlu0 %1716
      %1718 = vrot.lane.b32.xlu0 %v1686, 32
      %v1719 = vpop.permute.xlu0 %1718
      %1720 = vrot.lane.b32.xlu0 %v1687, 32
      %v1721 = vpop.permute.xlu0 %1720
      %1722 = vrot.lane.b32.xlu0 %v1688, 32
      %v1723 = vpop.permute.xlu0 %1722
      %1724 = vrot.lane.b32.xlu0 %v1689, 32
      %v1725 = vpop.permute.xlu0 %1724
      %1726 = vrot.lane.b32.xlu0 %v1690, 32
      %v1727 = vpop.permute.xlu0 %1726
      %1741 = vrot.lane.b32.xlu0 %v1680, 64
      %v1742 = vpop.permute.xlu0 %1741
      %1743 = vrot.lane.b32.xlu0 %v1681, 64
      %v1744 = vpop.permute.xlu0 %1743
      %1745 = vrot.lane.b32.xlu0 %v1682, 64
      %v1746 = vpop.permute.xlu0 %1745
      %1747 = vrot.lane.b32.xlu0 %v1683, 64
      %v1748 = vpop.permute.xlu0 %1747
      %1749 = vrot.lane.b32.xlu0 %v1684, 64
      %v1750 = vpop.permute.xlu0 %1749
      %1751 = vrot.lane.b32.xlu0 %v1685, 64
      %v1752 = vpop.permute.xlu0 %1751
      %1753 = vrot.lane.b32.xlu0 %v1686, 64
      %v1754 = vpop.permute.xlu0 %1753
      %1755 = vrot.lane.b32.xlu0 %v1687, 64
      %v1756 = vpop.permute.xlu0 %1755
      %1757 = vrot.lane.b32.xlu0 %v1688, 64
      %v1758 = vpop.permute.xlu0 %1757
      %1759 = vrot.lane.b32.xlu0 %v1689, 64
      %v1760 = vpop.permute.xlu0 %1759
      %1761 = vrot.lane.b32.xlu0 %v1690, 64
      %v1762 = vpop.permute.xlu0 %1761
      %1763 = vrot.lane.b32.xlu0 %v1691, 64
      %v1764 = vpop.permute.xlu0 %1763
      %v1777 = vsel %vm970, %v1678, %v1705
      %v1778 = vsel %vm970, %v1679, %v1707
      %v1779 = vsel %vm970, %v1680, %v1709
      %v1780 = vsel %vm970, %v1681, %v1711
      %v1781 = vsel %vm970, %v1682, %v1713
      %v1782 = vsel %vm970, %v1683, %v1715
      %v1783 = vsel %vm970, %v1684, %v1717
      %v1784 = vsel %vm970, %v1685, %v1719
      %v1785 = vsel %vm970, %v1686, %v1721
      %v1786 = vsel %vm970, %v1687, %v1723
      %v1787 = vsel %vm970, %v1688, %v1725
      %v1788 = vsel %vm970, %v1689, %v1727
      %v1789 = vsel %vm1168, %v1777, %v1742
      %v1790 = vsel %vm1168, %v1778, %v1744
      %v1791 = vsel %vm1168, %v1779, %v1746
      %v1792 = vsel %vm1168, %v1780, %v1748
      %v1793 = vsel %vm1168, %v1781, %v1750
      %v1794 = vsel %vm1168, %v1782, %v1752
      %v1795 = vsel %vm1168, %v1783, %v1754
      %v1796 = vsel %vm1168, %v1784, %v1756
      %v1797 = vsel %vm1168, %v1785, %v1758
      %v1798 = vsel %vm1168, %v1786, %v1760
      %v1799 = vsel %vm1168, %v1787, %v1762
      %v1800 = vsel %vm1168, %v1788, %v1764
      %s1801 = scalar_lea.vmem %s3, 192
      %v1802 = vld [vmem:[%s1801] sm:$0xff]
      %v1803 = vld [vmem:[%s1801 + $0x8] sm:$0xff]
      %v1804 = vld [vmem:[%s1801 + $0x10] sm:$0xff]
      %v1805 = vld [vmem:[%s1801 + $0x18] sm:$0xff]
      %v1806 = vld [vmem:[%s1801 + $0x20] sm:$0xff]
      %v1807 = vld [vmem:[%s1801 + $0x28] sm:$0xff]
      %v1808 = vld [vmem:[%s1801 + $0x30] sm:$0xff]
      %v1809 = vld [vmem:[%s1801 + $0x38] sm:$0xff]
      %v1810 = vld [vmem:[%s1801 + $0x40] sm:$0xff]
      %v1811 = vld [vmem:[%s1801 + $0x48] sm:$0xff]
      %v1812 = vld [vmem:[%s1801 + $0x50] sm:$0xff]
      %v1813 = vld [vmem:[%s1801 + $0x58] sm:$0xff]
      %v1814 = vld [vmem:[%s4 + $0x2] sm:$0x1]
      %v1815 = vperm.slane %v1814, 0
      %v1817 = vsel %vm1198, %v1789, 0
      %v1820 = vsel %vm1198, %v1790, 0
      %v1823 = vsel %vm1198, %v1791, 0
      %v1826 = vsel %vm1198, %v1792, 0
      %v1829 = vsel %vm1198, %v1793, 0
      %v1832 = vsel %vm1198, %v1794, 0
      %v1835 = vsel %vm1198, %v1795, 0
      %v1838 = vsel %vm1198, %v1796, 0
      %v1841 = vsel %vm1198, %v1797, 0
      %v1844 = vsel %vm1198, %v1798, 0
      %v1847 = vsel %vm1198, %v1799, 0
      %v1850 = vsel %vm1198, %v1800, 0
      %1852 = vmatpush.msra.mxu0 0.0
      %1853 = vmatpush.msra.mxu0 0.0
      %1854 = vmatpush.msra.mxu0 0.0
      %1855 = vmatpush.msra.mxu0 0.0
      %1856 = vmatpush.msra.mxu0 %v1813
      %1857 = vmatpush.msra.mxu0 %v1812
      %1858 = vmatpush.msra.mxu0 %v1811
      %1859 = vmatpush.msra.mxu0 %v1810
      %1860 = vmatpush.msra.mxu0 %v1809
      %1861 = vmatpush.msra.mxu0 %v1808
      %1862 = vmatpush.msra.mxu0 %v1807
      %1863 = vmatpush.msra.mxu0 %v1806
      %1864 = vmatpush.msra.mxu0 %v1805
      %1865 = vmatpush.msra.mxu0 %v1804
      %1866 = vmatpush.msra.mxu0 %v1803
      %1867 = vmatpush.msra.mxu0 %v1802
      %1868 = vmatmul.f32.gmra.mxu0 %v1817
      %v1869 = vpop.f32.mrf.mxu0
      %v1870 = vadd.f32 %v1815, %v1869
      %1871 = vmatmul.f32.gmra.mxu0 %v1820
      %v1872 = vpop.f32.mrf.mxu0
      %v1873 = vadd.f32 %v1815, %v1872
      %1874 = vmatmul.f32.gmra.mxu0 %v1823
      %v1875 = vpop.f32.mrf.mxu0
      %v1876 = vadd.f32 %v1815, %v1875
      %1877 = vmatmul.f32.gmra.mxu0 %v1826
      %v1878 = vpop.f32.mrf.mxu0
      %v1879 = vadd.f32 %v1815, %v1878
      %1880 = vmatmul.f32.gmra.mxu0 %v1829
      %v1881 = vpop.f32.mrf.mxu0
      %v1882 = vadd.f32 %v1815, %v1881
      %1883 = vmatmul.f32.gmra.mxu0 %v1832
      %v1884 = vpop.f32.mrf.mxu0
      %v1885 = vadd.f32 %v1815, %v1884
      %1886 = vmatmul.f32.gmra.mxu0 %v1835
      %v1887 = vpop.f32.mrf.mxu0
      %v1888 = vadd.f32 %v1815, %v1887
      %1889 = vmatmul.f32.gmra.mxu0 %v1838
      %v1890 = vpop.f32.mrf.mxu0
      %v1891 = vadd.f32 %v1815, %v1890
      %1892 = vmatmul.f32.gmra.mxu0 %v1841
      %v1893 = vpop.f32.mrf.mxu0
      %v1894 = vadd.f32 %v1815, %v1893
      %1895 = vmatmul.f32.gmra.mxu0 %v1844
      %v1896 = vpop.f32.mrf.mxu0
      %v1897 = vadd.f32 %v1815, %v1896
      %1898 = vmatmul.f32.gmra.mxu0 %v1847
      %v1899 = vpop.f32.mrf.mxu0
      %v1900 = vadd.f32 %v1815, %v1899
      %1901 = vmatmul.f32.gmra.mxu0 %v1850
      %v1902 = vpop.f32.mrf.mxu0
      %v1903 = vadd.f32 %v1815, %v1902
      %1904 = vdwg.mxu0
      %v1905 = vmax.f32 %v1870, 0.0
      %v1906 = vmax.f32 %v1873, 0.0
      %v1907 = vmax.f32 %v1876, 0.0
      %v1908 = vmax.f32 %v1879, 0.0
      %v1909 = vmax.f32 %v1882, 0.0
      %v1910 = vmax.f32 %v1885, 0.0
      %v1911 = vmax.f32 %v1888, 0.0
      %v1912 = vmax.f32 %v1891, 0.0
      %v1913 = vmax.f32 %v1894, 0.0
      %v1914 = vmax.f32 %v1897, 0.0
      %v1915 = vmax.f32 %v1900, 0.0
      %v1916 = vmax.f32 %v1903, 0.0
      %v1917 = vadd.f32 %v1905, %v1679
      %v1918 = vadd.f32 %v1906, %v1680
      %v1919 = vadd.f32 %v1907, %v1681
      %v1920 = vadd.f32 %v1908, %v1682
      %v1921 = vadd.f32 %v1909, %v1683
      %v1922 = vadd.f32 %v1910, %v1684
      %v1923 = vadd.f32 %v1911, %v1685
      %v1924 = vadd.f32 %v1912, %v1686
      %v1925 = vadd.f32 %v1913, %v1687
      %v1926 = vadd.f32 %v1914, %v1688
      %v1927 = vadd.f32 %v1915, %v1689
      %v1928 = vadd.f32 %v1916, %v1690
      %1929 = vst.msk [vmem:[#allocation2] sm:$0xff] %vm970, %v1917
      %1930 = vst.msk [vmem:[#allocation2 + $0x8] sm:$0xff] %vm970, %v1918
      %1931 = vst.msk [vmem:[#allocation2 + $0x10] sm:$0xff] %vm970, %v1919
      %1932 = vst.msk [vmem:[#allocation2 + $0x18] sm:$0xff] %vm970, %v1920
      %1933 = vst.msk [vmem:[#allocation2 + $0x20] sm:$0xff] %vm970, %v1921
      %1934 = vst.msk [vmem:[#allocation2 + $0x28] sm:$0xff] %vm970, %v1922
      %1935 = vst.msk [vmem:[#allocation2 + $0x30] sm:$0xff] %vm970, %v1923
      %1936 = vst.msk [vmem:[#allocation2 + $0x38] sm:$0xff] %vm970, %v1924
      %1937 = vst.msk [vmem:[#allocation2 + $0x40] sm:$0xff] %vm970, %v1925
      %1938 = vst.msk [vmem:[#allocation2 + $0x48] sm:$0xff] %vm970, %v1926
      %1939 = vst.msk [vmem:[#allocation2 + $0x50] sm:$0xff] %vm970, %v1927
      %1940 = vst.msk [vmem:[#allocation2 + $0x58] sm:$0xff] %vm970, %v1928
      %1941 = vst.msk [vmem:[%s401] sm:$0xff] %vm970, %v1917
      %1942 = vst.msk [vmem:[%s401 + $0x8] sm:$0xff] %vm970, %v1918
      %1943 = vst.msk [vmem:[%s401 + $0x10] sm:$0xff] %vm970, %v1919
      %1944 = vst.msk [vmem:[%s401 + $0x18] sm:$0xff] %vm970, %v1920
      %1945 = vst.msk [vmem:[%s401 + $0x20] sm:$0xff] %vm970, %v1921
      %1946 = vst.msk [vmem:[%s401 + $0x28] sm:$0xff] %vm970, %v1922
      %1947 = vst.msk [vmem:[%s401 + $0x30] sm:$0xff] %vm970, %v1923
      %1948 = vst.msk [vmem:[%s401 + $0x38] sm:$0xff] %vm970, %v1924
      %1949 = vst.msk [vmem:[%s401 + $0x40] sm:$0xff] %vm970, %v1925
      %1950 = vst.msk [vmem:[%s401 + $0x48] sm:$0xff] %vm970, %v1926
      %1951 = vst.msk [vmem:[%s401 + $0x50] sm:$0xff] %vm970, %v1927
      %1952 = vst.msk [vmem:[%s401 + $0x58] sm:$0xff] %vm970, %v1928
      %v1962 = vrot.slane %v1918, 1
      %v1963 = vrot.slane %v1919, 1
      %v1964 = vsel %vm442, %v1962, %v1963
      %v1965 = vrot.slane %v1920, 1
      %v1966 = vsel %vm442, %v1963, %v1965
      %v1967 = vrot.slane %v1921, 1
      %v1968 = vsel %vm442, %v1965, %v1967
      %v1969 = vrot.slane %v1922, 1
      %v1970 = vsel %vm442, %v1967, %v1969
      %v1971 = vrot.slane %v1923, 1
      %v1972 = vsel %vm442, %v1969, %v1971
      %v1973 = vrot.slane %v1924, 1
      %v1974 = vsel %vm442, %v1971, %v1973
      %v1975 = vrot.slane %v1925, 1
      %v1976 = vsel %vm442, %v1973, %v1975
      %v1977 = vrot.slane %v1926, 1
      %v1978 = vsel %vm442, %v1975, %v1977
      %1979 = vrot.lane.b32.xlu0 %v1964, 32
      %v1980 = vpop.permute.xlu0 %1979
      %1981 = vrot.lane.b32.xlu0 %v1966, 32
      %v1982 = vpop.permute.xlu0 %1981
      %1983 = vrot.lane.b32.xlu0 %v1968, 32
      %v1984 = vpop.permute.xlu0 %1983
      %1985 = vrot.lane.b32.xlu0 %v1970, 32
      %v1986 = vpop.permute.xlu0 %1985
      %1987 = vrot.lane.b32.xlu0 %v1972, 32
      %v1988 = vpop.permute.xlu0 %1987
      %1989 = vrot.lane.b32.xlu0 %v1974, 32
      %v1990 = vpop.permute.xlu0 %1989
      %1991 = vrot.lane.b32.xlu0 %v1976, 32
      %v1992 = vpop.permute.xlu0 %1991
      %1993 = vrot.lane.b32.xlu0 %v1978, 32
      %v1994 = vpop.permute.xlu0 %1993
      %1995 = vrot.lane.b32.xlu0 %v1977, 32
      %v1996 = vpop.permute.xlu0 %1995
      %v2006 = vrot.slane %v1918, 2
      %v2007 = vrot.slane %v1919, 2
      %v2008 = vsel %vm522, %v2006, %v2007
      %v2009 = vrot.slane %v1920, 2
      %v2010 = vsel %vm522, %v2007, %v2009
      %v2011 = vrot.slane %v1921, 2
      %v2012 = vsel %vm522, %v2009, %v2011
      %v2013 = vrot.slane %v1922, 2
      %v2014 = vsel %vm522, %v2011, %v2013
      %v2015 = vrot.slane %v1923, 2
      %v2016 = vsel %vm522, %v2013, %v2015
      %v2017 = vrot.slane %v1924, 2
      %v2018 = vsel %vm522, %v2015, %v2017
      %v2019 = vrot.slane %v1925, 2
      %v2020 = vsel %vm522, %v2017, %v2019
      %v2021 = vrot.slane %v1926, 2
      %v2022 = vsel %vm522, %v2019, %v2021
      %2023 = vrot.lane.b32.xlu0 %v2008, 64
      %v2024 = vpop.permute.xlu0 %2023
      %2025 = vrot.lane.b32.xlu0 %v2010, 64
      %v2026 = vpop.permute.xlu0 %2025
      %2027 = vrot.lane.b32.xlu0 %v2012, 64
      %v2028 = vpop.permute.xlu0 %2027
      %2029 = vrot.lane.b32.xlu0 %v2014, 64
      %v2030 = vpop.permute.xlu0 %2029
      %2031 = vrot.lane.b32.xlu0 %v2016, 64
      %v2032 = vpop.permute.xlu0 %2031
      %2033 = vrot.lane.b32.xlu0 %v2018, 64
      %v2034 = vpop.permute.xlu0 %2033
      %2035 = vrot.lane.b32.xlu0 %v2020, 64
      %v2036 = vpop.permute.xlu0 %2035
      %2037 = vrot.lane.b32.xlu0 %v2022, 64
      %v2038 = vpop.permute.xlu0 %2037
      %2039 = vrot.lane.b32.xlu0 %v2021, 64
      %v2040 = vpop.permute.xlu0 %2039
      %v2050 = vrot.slane %v1919, 3
      %v2051 = vrot.slane %v1920, 3
      %v2052 = vsel %vm602, %v2050, %v2051
      %v2053 = vrot.slane %v1921, 3
      %v2054 = vsel %vm602, %v2051, %v2053
      %v2055 = vrot.slane %v1922, 3
      %v2056 = vsel %vm602, %v2053, %v2055
      %v2057 = vrot.slane %v1923, 3
      %v2058 = vsel %vm602, %v2055, %v2057
      %v2059 = vrot.slane %v1924, 3
      %v2060 = vsel %vm602, %v2057, %v2059
      %v2061 = vrot.slane %v1925, 3
      %v2062 = vsel %vm602, %v2059, %v2061
      %v2063 = vrot.slane %v1926, 3
      %v2064 = vsel %vm602, %v2061, %v2063
      %2065 = vrot.lane.b32.xlu0 %v2050, 96
      %v2066 = vpop.permute.xlu0 %2065
      %2067 = vrot.lane.b32.xlu0 %v2052, 96
      %v2068 = vpop.permute.xlu0 %2067
      %2069 = vrot.lane.b32.xlu0 %v2054, 96
      %v2070 = vpop.permute.xlu0 %2069
      %2071 = vrot.lane.b32.xlu0 %v2056, 96
      %v2072 = vpop.permute.xlu0 %2071
      %2073 = vrot.lane.b32.xlu0 %v2058, 96
      %v2074 = vpop.permute.xlu0 %2073
      %2075 = vrot.lane.b32.xlu0 %v2060, 96
      %v2076 = vpop.permute.xlu0 %2075
      %2077 = vrot.lane.b32.xlu0 %v2062, 96
      %v2078 = vpop.permute.xlu0 %2077
      %2079 = vrot.lane.b32.xlu0 %v2064, 96
      %v2080 = vpop.permute.xlu0 %2079
      %2081 = vrot.lane.b32.xlu0 %v2063, 96
      %v2082 = vpop.permute.xlu0 %2081
      %v2093 = vrot.slane %v1919, 4
      %v2094 = vrot.slane %v1920, 4
      %v2095 = vsel %vm682, %v2093, %v2094
      %v2096 = vrot.slane %v1921, 4
      %v2097 = vsel %vm682, %v2094, %v2096
      %v2098 = vrot.slane %v1922, 4
      %v2099 = vsel %vm682, %v2096, %v2098
      %v2100 = vrot.slane %v1923, 4
      %v2101 = vsel %vm682, %v2098, %v2100
      %v2102 = vrot.slane %v1924, 4
      %v2103 = vsel %vm682, %v2100, %v2102
      %v2104 = vrot.slane %v1925, 4
      %v2105 = vsel %vm682, %v2102, %v2104
      %v2106 = vrot.slane %v1926, 4
      %v2107 = vsel %vm682, %v2104, %v2106
      %v2108 = vrot.slane %v1927, 4
      %v2109 = vsel %vm682, %v2106, %v2108
      %vm2119 = vcmask 1042432
      %v2120 = vrot.slane %v1919, 5
      %v2121 = vrot.slane %v1920, 5
      %v2122 = vsel %vm2119, %v2120, %v2121
      %v2123 = vrot.slane %v1921, 5
      %v2124 = vsel %vm2119, %v2121, %v2123
      %v2125 = vrot.slane %v1922, 5
      %v2126 = vsel %vm2119, %v2123, %v2125
      %v2127 = vrot.slane %v1923, 5
      %v2128 = vsel %vm2119, %v2125, %v2127
      %v2129 = vrot.slane %v1924, 5
      %v2130 = vsel %vm2119, %v2127, %v2129
      %v2131 = vrot.slane %v1925, 5
      %v2132 = vsel %vm2119, %v2129, %v2131
      %v2133 = vrot.slane %v1926, 5
      %v2134 = vsel %vm2119, %v2131, %v2133
      %v2135 = vrot.slane %v1927, 5
      %v2136 = vsel %vm2119, %v2133, %v2135
      %2137 = vrot.lane.b32.xlu0 %v2120, 32
      %v2138 = vpop.permute.xlu0 %2137
      %2139 = vrot.lane.b32.xlu0 %v2122, 32
      %v2140 = vpop.permute.xlu0 %2139
      %2141 = vrot.lane.b32.xlu0 %v2124, 32
      %v2142 = vpop.permute.xlu0 %2141
      %2143 = vrot.lane.b32.xlu0 %v2126, 32
      %v2144 = vpop.permute.xlu0 %2143
      %2145 = vrot.lane.b32.xlu0 %v2128, 32
      %v2146 = vpop.permute.xlu0 %2145
      %2147 = vrot.lane.b32.xlu0 %v2130, 32
      %v2148 = vpop.permute.xlu0 %2147
      %2149 = vrot.lane.b32.xlu0 %v2132, 32
      %v2150 = vpop.permute.xlu0 %2149
      %2151 = vrot.lane.b32.xlu0 %v2134, 32
      %v2152 = vpop.permute.xlu0 %2151
      %2153 = vrot.lane.b32.xlu0 %v2136, 32
      %v2154 = vpop.permute.xlu0 %2153
      %vm2164 = vcmask 1041408
      %v2165 = vrot.slane %v1919, 6
      %v2166 = vrot.slane %v1920, 6
      %v2167 = vsel %vm2164, %v2165, %v2166
      %v2168 = vrot.slane %v1921, 6
      %v2169 = vsel %vm2164, %v2166, %v2168
      %v2170 = vrot.slane %v1922, 6
      %v2171 = vsel %vm2164, %v2168, %v2170
      %v2172 = vrot.slane %v1923, 6
      %v2173 = vsel %vm2164, %v2170, %v2172
      %v2174 = vrot.slane %v1924, 6
      %v2175 = vsel %vm2164, %v2172, %v2174
      %v2176 = vrot.slane %v1925, 6
      %v2177 = vsel %vm2164, %v2174, %v2176
      %v2178 = vrot.slane %v1926, 6
      %v2179 = vsel %vm2164, %v2176, %v2178
      %v2180 = vrot.slane %v1927, 6
      %v2181 = vsel %vm2164, %v2178, %v2180
      %2182 = vrot.lane.b32.xlu0 %v2165, 64
      %v2183 = vpop.permute.xlu0 %2182
      %2184 = vrot.lane.b32.xlu0 %v2167, 64
      %v2185 = vpop.permute.xlu0 %2184
      %2186 = vrot.lane.b32.xlu0 %v2169, 64
      %v2187 = vpop.permute.xlu0 %2186
      %2188 = vrot.lane.b32.xlu0 %v2171, 64
      %v2189 = vpop.permute.xlu0 %2188
      %2190 = vrot.lane.b32.xlu0 %v2173, 64
      %v2191 = vpop.permute.xlu0 %2190
      %2192 = vrot.lane.b32.xlu0 %v2175, 64
      %v2193 = vpop.permute.xlu0 %2192
      %2194 = vrot.lane.b32.xlu0 %v2177, 64
      %v2195 = vpop.permute.xlu0 %2194
      %2196 = vrot.lane.b32.xlu0 %v2179, 64
      %v2197 = vpop.permute.xlu0 %2196
      %2198 = vrot.lane.b32.xlu0 %v2181, 64
      %v2199 = vpop.permute.xlu0 %2198
      %v2209 = vsel %vm970, %v1918, %v1980
      %v2210 = vsel %vm970, %v1919, %v1982
      %v2211 = vsel %vm970, %v1920, %v1984
      %v2212 = vsel %vm970, %v1921, %v1986
      %v2213 = vsel %vm970, %v1922, %v1988
      %v2214 = vsel %vm970, %v1923, %v1990
      %v2215 = vsel %vm970, %v1924, %v1992
      %v2216 = vsel %vm970, %v1925, %v1994
      %v2217 = vsel %vm970, %v1926, %v1996
      %v2218 = vsel %vm1168, %v2209, %v2024
      %v2219 = vsel %vm1168, %v2210, %v2026
      %v2220 = vsel %vm1168, %v2211, %v2028
      %v2221 = vsel %vm1168, %v2212, %v2030
      %v2222 = vsel %vm1168, %v2213, %v2032
      %v2223 = vsel %vm1168, %v2214, %v2034
      %v2224 = vsel %vm1168, %v2215, %v2036
      %v2225 = vsel %vm1168, %v2216, %v2038
      %v2226 = vsel %vm1168, %v2217, %v2040
      %v2227 = vsel %vm1198, %v2218, %v2066
      %v2228 = vsel %vm1198, %v2219, %v2068
      %v2229 = vsel %vm1198, %v2220, %v2070
      %v2230 = vsel %vm1198, %v2221, %v2072
      %v2231 = vsel %vm1198, %v2222, %v2074
      %v2232 = vsel %vm1198, %v2223, %v2076
      %v2233 = vsel %vm1198, %v2224, %v2078
      %v2234 = vsel %vm1198, %v2225, %v2080
      %v2235 = vsel %vm1198, %v2226, %v2082
      %v2236 = vsel %vm970, %v2093, %v2138
      %v2237 = vsel %vm970, %v2095, %v2140
      %v2238 = vsel %vm970, %v2097, %v2142
      %v2239 = vsel %vm970, %v2099, %v2144
      %v2240 = vsel %vm970, %v2101, %v2146
      %v2241 = vsel %vm970, %v2103, %v2148
      %v2242 = vsel %vm970, %v2105, %v2150
      %v2243 = vsel %vm970, %v2107, %v2152
      %v2244 = vsel %vm970, %v2109, %v2154
      %v2245 = vsel %vm1168, %v2236, %v2183
      %v2246 = vsel %vm1168, %v2237, %v2185
      %v2247 = vsel %vm1168, %v2238, %v2187
      %v2248 = vsel %vm1168, %v2239, %v2189
      %v2249 = vsel %vm1168, %v2240, %v2191
      %v2250 = vsel %vm1168, %v2241, %v2193
      %v2251 = vsel %vm1168, %v2242, %v2195
      %v2252 = vsel %vm1168, %v2243, %v2197
      %v2253 = vsel %vm1168, %v2244, %v2199
      %v2254 = vld [vmem:[%s5] sm:$0xff]
      %v2255 = vld [vmem:[%s5 + $0x8] sm:$0xff]
      %v2256 = vld [vmem:[%s5 + $0x10] sm:$0xff]
      %v2257 = vld [vmem:[%s5 + $0x18] sm:$0xff]
      %v2258 = vld [vmem:[%s5 + $0x20] sm:$0xff]
      %v2259 = vld [vmem:[%s5 + $0x28] sm:$0xff]
      %v2260 = vld [vmem:[%s5 + $0x30] sm:$0xff]
      %v2261 = vld [vmem:[%s5 + $0x38] sm:$0xff]
      %v2262 = vld [vmem:[%s5 + $0x40] sm:$0xff]
      %v2263 = vld [vmem:[%s5 + $0x48] sm:$0xff]
      %v2264 = vld [vmem:[%s5 + $0x50] sm:$0xff]
      %v2265 = vld [vmem:[%s5 + $0x58] sm:$0xff]
      %v2266 = vld [vmem:[%s5 + $0x60] sm:$0xff]
      %v2267 = vld [vmem:[%s5 + $0x68] sm:$0xff]
      %v2268 = vld [vmem:[%s5 + $0x70] sm:$0xff]
      %v2269 = vld [vmem:[%s5 + $0x78] sm:$0xff]
      %v2270 = vld [vmem:[%s5 + $0x80] sm:$0xff]
      %v2271 = vld [vmem:[%s5 + $0x88] sm:$0xff]
      %v2272 = vld [vmem:[%s5 + $0x90] sm:$0xff]
      %v2273 = vld [vmem:[%s5 + $0x98] sm:$0xff]
      %v2274 = vld [vmem:[%s5 + $0xa0] sm:$0xff]
      %v2275 = vld [vmem:[%s5 + $0xa8] sm:$0xff]
      %v2276 = vld [vmem:[%s5 + $0xb0] sm:$0xff]
      %v2277 = vld [vmem:[%s5 + $0xb8] sm:$0xff]
      %v2278 = vld [vmem:[%s5 + $0xc0] sm:$0xff]
      %v2279 = vld [vmem:[%s5 + $0xc8] sm:$0xff]
      %v2280 = vld [vmem:[%s5 + $0xd0] sm:$0xff]
      %v2281 = vld [vmem:[%s5 + $0xd8] sm:$0xff]
      %s2282 = sld [smem:[#allocation3]]
      %v2283 = vstv %s2282
      %v2302 = vrot.slane %v2227, 5
      %v2303 = vrot.slane %v2228, 5
      %v2304 = vsel %vm2119, %v2302, %v2303
      %v2305 = vrot.slane %v2245, 5
      %v2306 = vrot.slane %v2246, 5
      %v2307 = vsel %vm2119, %v2305, %v2306
      %v2308 = vrot.slane %v2229, 5
      %v2309 = vsel %vm2119, %v2303, %v2308
      %v2310 = vrot.slane %v2247, 5
      %v2311 = vsel %vm2119, %v2306, %v2310
      %v2312 = vrot.slane %v2230, 5
      %v2313 = vsel %vm2119, %v2308, %v2312
      %v2314 = vrot.slane %v2248, 5
      %v2315 = vsel %vm2119, %v2310, %v2314
      %v2316 = vrot.slane %v2231, 5
      %v2317 = vsel %vm2119, %v2312, %v2316
      %v2318 = vrot.slane %v2249, 5
      %v2319 = vsel %vm2119, %v2314, %v2318
      %v2320 = vrot.slane %v2232, 5
      %v2321 = vsel %vm2119, %v2316, %v2320
      %v2322 = vrot.slane %v2250, 5
      %v2323 = vsel %vm2119, %v2318, %v2322
      %v2324 = vrot.slane %v2233, 5
      %v2325 = vsel %vm2119, %v2320, %v2324
      %v2326 = vrot.slane %v2251, 5
      %v2327 = vsel %vm2119, %v2322, %v2326
      %v2328 = vrot.slane %v2234, 5
      %v2329 = vsel %vm2119, %v2324, %v2328
      %v2330 = vrot.slane %v2252, 5
      %v2331 = vsel %vm2119, %v2326, %v2330
      %v2332 = vrot.slane %v2235, 5
      %v2333 = vsel %vm2119, %v2328, %v2332
      %v2334 = vrot.slane %v2253, 5
      %v2335 = vsel %vm2119, %v2330, %v2334
      %v2344 = vsel %vm1198, %v2307, 0
      %v2346 = vsel %vm1198, %v2311, 0
      %v2348 = vsel %vm1198, %v2315, 0
      %v2350 = vsel %vm1198, %v2319, 0
      %v2352 = vsel %vm1198, %v2323, 0
      %v2354 = vsel %vm1198, %v2327, 0
      %v2356 = vsel %vm1198, %v2331, 0
      %v2358 = vsel %vm1198, %v2335, 0
      %2360 = vmatpush.msra.mxu0 %v2269
      %2361 = vmatpush.msra.mxu0 %v2268
      %2362 = vmatpush.msra.mxu0 %v2267
      %2363 = vmatpush.msra.mxu0 %v2266
      %2364 = vmatpush.msra.mxu0 %v2265
      %2365 = vmatpush.msra.mxu0 %v2264
      %2366 = vmatpush.msra.mxu0 %v2263
      %2367 = vmatpush.msra.mxu0 %v2262
      %2368 = vmatpush.msra.mxu0 %v2261
      %2369 = vmatpush.msra.mxu0 %v2260
      %2370 = vmatpush.msra.mxu0 %v2259
      %2371 = vmatpush.msra.mxu0 %v2258
      %2372 = vmatpush.msra.mxu0 %v2257
      %2373 = vmatpush.msra.mxu0 %v2256
      %2374 = vmatpush.msra.mxu0 %v2255
      %2375 = vmatpush.msra.mxu0 %v2254
      %2376 = vmatmul.f32.gmra.mxu0 %v2304
      %v2377 = vpop.f32.mrf.mxu0
      %v2378 = vadd.f32 %v2283, %v2377
      %2379 = vmatmul.f32.gmra.mxu0 %v2309
      %v2380 = vpop.f32.mrf.mxu0
      %v2381 = vadd.f32 %v2283, %v2380
      %2382 = vmatmul.f32.gmra.mxu0 %v2313
      %v2383 = vpop.f32.mrf.mxu0
      %v2384 = vadd.f32 %v2283, %v2383
      %2385 = vmatmul.f32.gmra.mxu0 %v2317
      %v2386 = vpop.f32.mrf.mxu0
      %v2387 = vadd.f32 %v2283, %v2386
      %2388 = vmatmul.f32.gmra.mxu0 %v2321
      %v2389 = vpop.f32.mrf.mxu0
      %v2390 = vadd.f32 %v2283, %v2389
      %2391 = vmatmul.f32.gmra.mxu0 %v2325
      %v2392 = vpop.f32.mrf.mxu0
      %v2393 = vadd.f32 %v2283, %v2392
      %2394 = vmatmul.f32.gmra.mxu0 %v2329
      %v2395 = vpop.f32.mrf.mxu0
      %v2396 = vadd.f32 %v2283, %v2395
      %2397 = vmatmul.f32.gmra.mxu0 %v2333
      %v2398 = vpop.f32.mrf.mxu0
      %v2399 = vadd.f32 %v2283, %v2398
      %2400 = vdwg.mxu0
      %2401 = vmatpush.msra.mxu0 0.0
      %2402 = vmatpush.msra.mxu0 0.0
      %2403 = vmatpush.msra.mxu0 0.0
      %2404 = vmatpush.msra.mxu0 0.0
      %2405 = vmatpush.msra.mxu0 %v2281
      %2406 = vmatpush.msra.mxu0 %v2280
      %2407 = vmatpush.msra.mxu0 %v2279
      %2408 = vmatpush.msra.mxu0 %v2278
      %2409 = vmatpush.msra.mxu0 %v2277
      %2410 = vmatpush.msra.mxu0 %v2276
      %2411 = vmatpush.msra.mxu0 %v2275
      %2412 = vmatpush.msra.mxu0 %v2274
      %2413 = vmatpush.msra.mxu0 %v2273
      %2414 = vmatpush.msra.mxu0 %v2272
      %2415 = vmatpush.msra.mxu0 %v2271
      %2416 = vmatpush.msra.mxu0 %v2270
      %2417 = vmatmul.f32.gmra.mxu0 %v2344
      %v2418 = vpop.f32.mrf.mxu0
      %v2419 = vadd.f32 %v2378, %v2418
      %2420 = vmatmul.f32.gmra.mxu0 %v2346
      %v2421 = vpop.f32.mrf.mxu0
      %v2422 = vadd.f32 %v2381, %v2421
      %2423 = vmatmul.f32.gmra.mxu0 %v2348
      %v2424 = vpop.f32.mrf.mxu0
      %v2425 = vadd.f32 %v2384, %v2424
      %2426 = vmatmul.f32.gmra.mxu0 %v2350
      %v2427 = vpop.f32.mrf.mxu0
      %v2428 = vadd.f32 %v2387, %v2427
      %2429 = vmatmul.f32.gmra.mxu0 %v2352
      %v2430 = vpop.f32.mrf.mxu0
      %v2431 = vadd.f32 %v2390, %v2430
      %2432 = vmatmul.f32.gmra.mxu0 %v2354
      %v2433 = vpop.f32.mrf.mxu0
      %v2434 = vadd.f32 %v2393, %v2433
      %2435 = vmatmul.f32.gmra.mxu0 %v2356
      %v2436 = vpop.f32.mrf.mxu0
      %v2437 = vadd.f32 %v2396, %v2436
      %2438 = vmatmul.f32.gmra.mxu0 %v2358
      %v2439 = vpop.f32.mrf.mxu0
      %v2440 = vadd.f32 %v2399, %v2439
      %2441 = vdwg.mxu0
      %vm2442 = vcmask 7168
      %2443 = vst.msk [vmem:[%s406] sm:$0xff] %vm2442, %v2419
      %2444 = vst.msk [vmem:[%s406 + $0x8] sm:$0xff] %vm2442, %v2422
      %2445 = vst.msk [vmem:[%s406 + $0x10] sm:$0xff] %vm2442, %v2425
      %2446 = vst.msk [vmem:[%s406 + $0x18] sm:$0xff] %vm2442, %v2428
      %2447 = vst.msk [vmem:[%s406 + $0x20] sm:$0xff] %vm2442, %v2431
      %2448 = vst.msk [vmem:[%s406 + $0x28] sm:$0xff] %vm2442, %v2434
      %2449 = vst.msk [vmem:[%s406 + $0x30] sm:$0xff] %vm2442, %v2437
      %2450 = vst.msk [vmem:[%s406 + $0x38] sm:$0xff] %vm2442, %v2440
      %v2451 = vsel %vm970, %v1917, 0.0
      %v2452 = vsel %vm970, %v1918, 0.0
      %v2453 = vadd.f32 %v2451, %v2452
      %v2454 = vsel %vm970, %v1919, 0.0
      %v2455 = vadd.f32 %v2453, %v2454
      %v2456 = vsel %vm970, %v1920, 0.0
      %v2457 = vadd.f32 %v2455, %v2456
      %v2458 = vsel %vm970, %v1921, 0.0
      %v2459 = vadd.f32 %v2457, %v2458
      %v2460 = vsel %vm970, %v1922, 0.0
      %v2461 = vadd.f32 %v2459, %v2460
      %v2462 = vsel %vm970, %v1923, 0.0
      %v2463 = vadd.f32 %v2461, %v2462
      %v2464 = vsel %vm970, %v1924, 0.0
      %v2465 = vadd.f32 %v2463, %v2464
      %v2466 = vsel %vm970, %v1925, 0.0
      %v2467 = vadd.f32 %v2465, %v2466
      %v2468 = vsel %vm970, %v1926, 0.0
      %v2469 = vadd.f32 %v2467, %v2468
      %v2470 = vsel %vm970, %v1927, 0.0
      %v2471 = vadd.f32 %v2469, %v2470
      %v2472 = vsel %vm970, %v1928, 0.0
      %v2473 = vadd.f32 %v2471, %v2472
      %v2474 = vrot.slane %v2473, 4
      %v2475 = vadd.f32 %v2473, %v2474
      %v2476 = vrot.slane %v2475, 2
      %v2477 = vadd.f32 %v2475, %v2476
      %v2478 = vrot.slane %v2477, 1
      %v2479 = vadd.f32 %v2477, %v2478
      %v2480 = vrcp.pop 96.0
      %v2481 = vmul.f32 96.0, %v2480
      %v2482 = vsub.f32 1.0, %v2481
      %v2483 = vmul.f32 %v2480, %v2482
      %v2484 = vadd.f32 %v2480, %v2483
      %vm2485 = vweird.f32 %v2480
      %v2486 = vsel %vm2485, %v2480, %v2484
      %v2487 = vmul.f32 %v2479, %v2486
      %v2488 = vld [vmem:[%s7] sm:$0xff]
      %v2489 = vld [vmem:[%s7 + $0x8] sm:$0xff]
      %v2490 = vld [vmem:[%s7 + $0x10] sm:$0xff]
      %v2491 = vld [vmem:[%s7 + $0x18] sm:$0xff]
      %s2492 = sld [smem:[#allocation4]]
      %v2493 = vstv %s2492
      %v2495 = vsel %vm970, %v2487, 0
      %2497 = vmatpush.msra.mxu0 0.0
      %2498 = vmatpush.msra.mxu0 0.0
      %2499 = vmatpush.msra.mxu0 0.0
      %2500 = vmatpush.msra.mxu0 0.0
      %2501 = vmatpush.msra.mxu0 0.0
      %2502 = vmatpush.msra.mxu0 0.0
      %2503 = vmatpush.msra.mxu0 0.0
      %2504 = vmatpush.msra.mxu0 0.0
      %2505 = vmatpush.msra.mxu0 0.0
      %2506 = vmatpush.msra.mxu0 0.0
      %2507 = vmatpush.msra.mxu0 0.0
      %2508 = vmatpush.msra.mxu0 0.0
      %2509 = vmatpush.msra.mxu0 %v2491
      %2510 = vmatpush.msra.mxu0 %v2490
      %2511 = vmatpush.msra.mxu0 %v2489
      %2512 = vmatpush.msra.mxu0 %v2488
      %2513 = vmatmul.f32.gmra.mxu0 %v2495
      %v2514 = vpop.f32.mrf.mxu0
      %v2515 = vadd.f32 %v2493, %v2514
      %2516 = vdwg.mxu0
      %vm2517 = vcmask 0
      %2518 = vst.msk [vmem:[%s409] sm:$0x1] %vm2517, %v2515
      %p2519 = scmp.lt.s32.totalorder %s25, 1
      %s2520 = scalar_select %p2519, %s25, 1
      %s2521 = smul.addr %s2520, 12
      %s2522 = smul.addr %s2521, 8
      %s2523 = scalar_lea.vmem %s9, %s2522
      %p2524 = scmp.lt.s32.totalorder %s25, 1
      %s2525 = scalar_select %p2524, %s25, 1
      %s2526 = smul.addr %s2525, 8
      %s2527 = smul.addr %s2526, 8
      %s2528 = scalar_lea.vmem %s10, %s2527
      %p2529 = scmp.lt.s32.totalorder %s25, 1
      %s2530 = scalar_select %p2529, %s25, 1
      %s2531 = scalar_lea.vmem %s11, %s2530
      // Predicated region
      $region57: #{tpu_custom_call.1} parent=55 // pred_check
        %p2532 = pneg %p237
      $region58: #{tpu_custom_call.1} parent=55 // pred_check_branch
        %2534 = sbr.rel (%p2532) target = $region60
      $region59: #{tpu_custom_call.1} parent=55 // pred_region
        _
      $region60: #{tpu_custom_call.1} parent=55 // pred_fallthru
        _
      // Predicated region
      $region61: #{tpu_custom_call.1} parent=55 // pred_check
        %p2535 = pneg %p263
      $region62: #{tpu_custom_call.1} parent=55 // pred_check_branch
        %2537 = sbr.rel (%p2535) target = $region64
      $region63: #{tpu_custom_call.1} parent=55 // pred_region
        _
      $region64: #{tpu_custom_call.1} parent=55 // pred_fallthru
        _
      // Predicated region
      $region65: #{tpu_custom_call.1} parent=55 // pred_check
        %p2538 = pneg %p289
      $region66: #{tpu_custom_call.1} parent=55 // pred_check_branch
        %2540 = sbr.rel (%p2538) target = $region68
      $region67: #{tpu_custom_call.1} parent=55 // pred_region
        _
      $region68: #{tpu_custom_call.1} parent=55 // pred_fallthru
        _
    $region56: #{tpu_custom_call.1} parent=5 // pred_fallthru
      _
    %p2541 = scmp.le.s32.totalorder 2, %s20
    // Predicated region
    $region69: #{tpu_custom_call.1} parent=5 // pred_check
      %p2542 = pneg %p2541
    $region70: #{tpu_custom_call.1} parent=5 // pred_check_branch
      %2544 = sbr.rel (%p2542) target = $region72
    $region71: #{tpu_custom_call.1} parent=5 // pred_region
      %s2545 = ssub.s32 %s20, 2
      // Predicated region
      $region73: #{tpu_custom_call.1} parent=71 // pred_check
        %p2546 = pneg %p243
      $region74: #{tpu_custom_call.1} parent=71 // pred_check_branch
        %2548 = sbr.rel (%p2546) target = $region76
      $region75: #{tpu_custom_call.1} parent=71 // pred_region
        %p2549 = scmp.lt.s32.totalorder %s26, 1
        %s2550 = scalar_select %p2549, %s26, 1
        %s2551 = smul.addr %s2550, 12
        %s2552 = smul.addr %s2551, 8
        %s2553 = scalar_lea.vmem %s9, %s2552
      $region76: #{tpu_custom_call.1} parent=71 // pred_fallthru
        _
      // Predicated region
      $region77: #{tpu_custom_call.1} parent=71 // pred_check
        %p2554 = pneg %p269
      $region78: #{tpu_custom_call.1} parent=71 // pred_check_branch
        %2556 = sbr.rel (%p2554) target = $region80
      $region79: #{tpu_custom_call.1} parent=71 // pred_region
        %p2557 = scmp.lt.s32.totalorder %s26, 1
        %s2558 = scalar_select %p2557, %s26, 1
        %s2559 = smul.addr %s2558, 8
        %s2560 = smul.addr %s2559, 8
        %s2561 = scalar_lea.vmem %s10, %s2560
      $region80: #{tpu_custom_call.1} parent=71 // pred_fallthru
        _
      // Predicated region
      $region81: #{tpu_custom_call.1} parent=71 // pred_check
        %p2562 = pneg %p295
      $region82: #{tpu_custom_call.1} parent=71 // pred_check_branch
        %2564 = sbr.rel (%p2562) target = $region84
      $region83: #{tpu_custom_call.1} parent=71 // pred_region
        %p2565 = scmp.lt.s32.totalorder %s26, 1
        %s2566 = scalar_select %p2565, %s26, 1
        %s2567 = scalar_lea.vmem %s11, %s2566
      $region84: #{tpu_custom_call.1} parent=71 // pred_fallthru
        _
    $region72: #{tpu_custom_call.1} parent=5 // pred_fallthru
      _
  $region6: #{tpu_custom_call.1} parent=0 // loop_footer
    %s24 = sadd.s32 1, %s20
  $region7: #{tpu_custom_call.1} parent=0 // loop_footer_branch
    %19 = sbr.rel target = $region3
  $region8: #{tpu_custom_call.1} parent=0 // loop_exit
    _

</llo_original>
